<compile_context>
chip_gen: v7x
topology: tpu7x:2x2x1
jax: 0.10.0
libtpu: 0.0.40
codegen_flags: <defaults>
</compile_context>

<pallas_src>
import math
import functools

import jax
import jax.numpy as jnp
from jax.experimental import pallas as pl
from jax.experimental.pallas import tpu as pltpu

# ---------------- model hyper-parameters (small, consistent with the module) --
FEATURE_SIZE = 32   # d_model (divisible by nhead)
NHEAD = 8
NUM_LAYERS = 2      # num_transformer_layers
DIM_FF = 64         # dim_feedforward
HIDDEN = 64         # hidden_layer_size of the regressor
BATCH = 2
LN_EPS = 1e-5
LANES = 128         # lane width used for packed vector rows / head output

_VMEM = pl.BlockSpec(memory_space=pltpu.MemorySpace.VMEM)


# ---------------- in-kernel helpers ------------------------------------------
def _layer_norm(x, g, b):
    mu = jnp.mean(x, axis=-1, keepdims=True)
    var = jnp.mean((x - mu) ** 2, axis=-1, keepdims=True)
    return (x - mu) * jax.lax.rsqrt(var + LN_EPS) * g + b


# ---------------- fused forward kernel ----------------------------------------
def fused_forward_kernel(src_ref, w_attn_ref, w_ff1_ref, w_ff2_ref, vecs_ref,
                         h_attn_ref, h_r1_ref, h_r2_ref, h_vecs_ref,
                         emb_ref, head_ref, *, num_layers, scale):
    D = src_ref.shape[-1]
    F = w_ff1_ref.shape[-1]
    H = h_r1_ref.shape[-1]

    hvec = h_vecs_ref[...]                 # (8, 128) packed head/const rows
    pe = hvec[4:5, :D]                     # positional encoding @ position 0
    x = src_ref[...] * scale + pe          # src * sqrt(d_model) + PE   (B, D)

    # --- encoder layers, statically unrolled (post-norm, ReLU FFN, no dropout)
    for l in range(num_layers):
        wv_wo = w_attn_ref[l]              # (2D, D): rows [0:D)=Wv, [D:2D)=Wo
        wv, wo = wv_wo[:D], wv_wo[D:]
        vr = vecs_ref[l]                   # (8, 128) packed per-layer vectors
        bv, bo = vr[0:1, :D], vr[1:2, :D]
        bf1, bf2 = vr[2:3, :F], vr[3:4, :D]
        g1, b1 = vr[4:5, :D], vr[5:6, :D]
        g2, b2 = vr[6:7, :D], vr[7:8, :D]

        # seq_len == 1: softmax over the single key position is exactly 1,
        # so self-attention reduces to (x @ Wv + bv) @ Wo + bo.
        v = jnp.dot(x, wv, preferred_element_type=jnp.float32) + bv
        attn = jnp.dot(v, wo, preferred_element_type=jnp.float32) + bo
        h = _layer_norm(x + attn, g1, b1)
        f = jnp.maximum(
            jnp.dot(h, w_ff1_ref[l], preferred_element_type=jnp.float32) + bf1,
            0.0)
        f = jnp.dot(f, w_ff2_ref[l], preferred_element_type=jnp.float32) + bf2
        x = _layer_norm(h + f, g2, b2)

    emb_ref[...] = x                       # transformer_output (B, D)

    # --- final MultiheadAttention (seq-1 identity) + regressor, lane-dense out
    h_wv_wo = h_attn_ref[...]              # (2D, D)
    wv, wo = h_wv_wo[:D], h_wv_wo[D:]
    bv, bo = hvec[0:1, :D], hvec[1:2, :D]
    br1, br2p = hvec[2:3, :H], hvec[3:4, :]     # br2p: (1,128), lane 0 only
    v = jnp.dot(x, wv, preferred_element_type=jnp.float32) + bv
    attn = jnp.dot(v, wo, preferred_element_type=jnp.float32) + bo
    r = jnp.maximum(
        jnp.dot(attn, h_r1_ref[...], preferred_element_type=jnp.float32) + br1,
        0.0)
    # h_r2_ref is (H, 128) with Wr2 in lane 0 -> regression lands in lane 0.
    head_ref[...] = (jnp.dot(r, h_r2_ref[...],
                             preferred_element_type=jnp.float32) + br2p)


# ---------------- wrapper ------------------------------------------------------
def pallas_forward(src, packed, return_embeddings=True, return_attention=True):
    B, D = src.shape
    emb, head_out = pl.pallas_call(
        functools.partial(fused_forward_kernel,
                          num_layers=NUM_LAYERS, scale=math.sqrt(D)),
        out_shape=(jax.ShapeDtypeStruct((B, D), jnp.float32),
                   jax.ShapeDtypeStruct((B, LANES), jnp.float32)),
        in_specs=[_VMEM] * 9,
        out_specs=(_VMEM, _VMEM),
    )(src, packed["w_attn"], packed["w_ff1"], packed["w_ff2"], packed["vecs"],
      packed["h_attn"], packed["h_r1"], packed["h_r2"], packed["h_vecs"])

    outputs = {"regression_output": head_out[:, 0:1]}          # (B, 1)
    if return_embeddings:
        outputs["embeddings"] = emb.reshape(1, B, D)           # (1, B, D)
    if return_attention:
        # softmax over a single key position is exactly 1 (also after
        # averaging over heads) -> attention_weights is constant 1.0.
        outputs["attention_weights"] = jnp.ones((B, 1, 1), jnp.float32)
    return outputs


# ---------------- deterministic parameter init ---------------------------------
def _dense(key, n_in, n_out):
    k1, k2 = jax.random.split(key)
    bound = 1.0 / math.sqrt(n_in)
    w = jax.random.uniform(k1, (n_in, n_out), jnp.float32, -bound, bound)
    b = jax.random.uniform(k2, (1, n_out), jnp.float32, -bound, bound)
    return w, b


def _mha_vo_params(key, d):
    # q/k projections of the real module are algebraically eliminated for
    # seq_len == 1 (softmax over one key == 1), so only Wv/Wo affect outputs.
    ks = jax.random.split(key, 2)
    wv, bv = _dense(ks[0], d, d)
    wo, bo = _dense(ks[1], d, d)
    return dict(wv=wv, bv=bv, wo=wo, bo=bo)


def init_params(key):
    D, F, H = FEATURE_SIZE, DIM_FF, HIDDEN
    # positional encoding at position 0: sin(0)=0 on even dims, cos(0)=1 on odd
    pe_row = jnp.tile(jnp.array([0.0, 1.0], jnp.float32), D // 2).reshape(1, D)

    keys = jax.random.split(key, NUM_LAYERS + 1)
    layers = []
    for li in range(NUM_LAYERS):
        lk = jax.random.split(keys[li], 3)
        layer = _mha_vo_params(lk[0], D)
        wf1, bf1 = _dense(lk[1], D, F)
        wf2, bf2 = _dense(lk[2], F, D)
        layer.update(wf1=wf1, bf1=bf1, wf2=wf2, bf2=bf2,
                     g1=jnp.ones((1, D), jnp.float32),
                     b1=jnp.zeros((1, D), jnp.float32),
                     g2=jnp.ones((1, D), jnp.float32),
                     b2=jnp.zeros((1, D), jnp.float32))
        layers.append(layer)

    hk = jax.random.split(keys[-1], 3)
    head = _mha_vo_params(hk[0], D)
    wr1, br1 = _dense(hk[1], D, H)
    wr2, br2 = _dense(hk[2], H, 1)
    head.update(wr1=wr1, br1=br1, wr2=wr2, br2=br2)

    return dict(pe_row=pe_row, layers=layers, head=head)


# ---------------- host-side packing (few contiguous kernel inputs) -------------
def _row(v, width=LANES):
    v = jnp.asarray(v, jnp.float32).reshape(1, -1)
    return jnp.pad(v, ((0, 0), (0, width - v.shape[1])))


def pack_params(params):
    layers = params["layers"]
    # (L, 2D, D): Wv stacked over Wo
    w_attn = jnp.stack(
        [jnp.concatenate([lp["wv"], lp["wo"]], axis=0) for lp in layers])
    w_ff1 = jnp.stack([lp["wf1"] for lp in layers])          # (L, D, F)
    w_ff2 = jnp.stack([lp["wf2"] for lp in layers])          # (L, F, D)
    # (L, 8, 128): bv, bo, bf1, bf2, g1, b1, g2, b2
    vecs = jnp.stack([
        jnp.concatenate([_row(lp["bv"]), _row(lp["bo"]), _row(lp["bf1"]),
                         _row(lp["bf2"]), _row(lp["g1"]), _row(lp["b1"]),
                         _row(lp["g2"]), _row(lp["b2"])], axis=0)
        for lp in layers])

    hp = params["head"]
    h_attn = jnp.concatenate([hp["wv"], hp["wo"]], axis=0)   # (2D, D)
    h_r1 = hp["wr1"]                                         # (D, H)
    h_r2 = jnp.pad(hp["wr2"], ((0, 0), (0, LANES - hp["wr2"].shape[1])))  # (H,128)
    # (8, 128): bv, bo, br1, br2(lane0), pe_row, zeros...
    h_vecs = jnp.concatenate(
        [_row(hp["bv"]), _row(hp["bo"]), _row(hp["br1"]), _row(hp["br2"]),
         _row(params["pe_row"]), jnp.zeros((3, LANES), jnp.float32)], axis=0)

    return dict(w_attn=w_attn, w_ff1=w_ff1, w_ff2=w_ff2, vecs=vecs,
                h_attn=h_attn, h_r1=h_r1, h_r2=h_r2, h_vecs=h_vecs)


if __name__ == "__main__":
    src = jax.random.normal(jax.random.PRNGKey(0), (BATCH, FEATURE_SIZE),
                            jnp.float32)
    params = init_params(jax.random.PRNGKey(42))
    packed = pack_params(params)

    outs = pallas_forward(src, packed)
    jax.block_until_ready(outs)

    assert outs["regression_output"].shape == (BATCH, 1)
    assert outs["embeddings"].shape == (1, BATCH, FEATURE_SIZE)
    assert outs["attention_weights"].shape == (BATCH, 1, 1)
    assert bool(jnp.all(jnp.isfinite(outs["regression_output"])))
    # TODO(synk): dropout (p=0.4) is intentionally omitted — eval/inference semantics.
    print("KERNEL_OK")
</pallas_src>

<mosaic_0001>
module attributes {stable_mosaic.version = 11 : i64} {
  func.func @fused_forward_kernel(%arg0: memref<2x32xf32, #tpu.memory_space<vmem>>, %arg1: memref<2x64x32xf32, #tpu.memory_space<vmem>>, %arg2: memref<2x32x64xf32, #tpu.memory_space<vmem>>, %arg3: memref<2x64x32xf32, #tpu.memory_space<vmem>>, %arg4: memref<2x8x128xf32, #tpu.memory_space<vmem>>, %arg5: memref<64x32xf32, #tpu.memory_space<vmem>>, %arg6: memref<32x64xf32, #tpu.memory_space<vmem>>, %arg7: memref<64x128xf32, #tpu.memory_space<vmem>>, %arg8: memref<8x128xf32, #tpu.memory_space<vmem>>, %arg9: memref<2x32xf32, #tpu.memory_space<vmem>>, %arg10: memref<2x128xf32, #tpu.memory_space<vmem>>) attributes {dimension_semantics = [], scalar_prefetch = 0 : i64, scratch_operands = 0 : i64, tpu.core_type = #tpu.core_type<tc>} {
    %c0 = arith.constant 0 : index
    %c0_0 = arith.constant 0 : index
    %0 = vector.load %arg8[%c0, %c0_0] : memref<8x128xf32, #tpu.memory_space<vmem>>, vector<8x128xf32>
    %1 = vector.extract_strided_slice %0 {offsets = [4, 0], sizes = [1, 32], strides = [1, 1]} : vector<8x128xf32> to vector<1x32xf32>
    %c0_1 = arith.constant 0 : index
    %c0_2 = arith.constant 0 : index
    %2 = vector.load %arg0[%c0_1, %c0_2] : memref<2x32xf32, #tpu.memory_space<vmem>>, vector<2x32xf32>
    %cst = arith.constant 5.65685415 : f32
    %3 = vector.broadcast %cst : f32 to vector<2x32xf32>
    %4 = arith.mulf %2, %3 : vector<2x32xf32>
    %5 = vector.broadcast %1 : vector<1x32xf32> to vector<2x32xf32>
    %6 = arith.addf %4, %5 : vector<2x32xf32>
    %c0_3 = arith.constant 0 : index
    %c0_4 = arith.constant 0 : index
    %c0_5 = arith.constant 0 : index
    %7 = vector.load %arg1[%c0_3, %c0_4, %c0_5] : memref<2x64x32xf32, #tpu.memory_space<vmem>>, vector<1x64x32xf32>
    %8 = vector.shape_cast %7 : vector<1x64x32xf32> to vector<64x32xf32>
    %9 = vector.extract_strided_slice %8 {offsets = [0, 0], sizes = [32, 32], strides = [1, 1]} : vector<64x32xf32> to vector<32x32xf32>
    %10 = vector.extract_strided_slice %8 {offsets = [32, 0], sizes = [32, 32], strides = [1, 1]} : vector<64x32xf32> to vector<32x32xf32>
    %c0_6 = arith.constant 0 : index
    %c0_7 = arith.constant 0 : index
    %c0_8 = arith.constant 0 : index
    %11 = vector.load %arg4[%c0_6, %c0_7, %c0_8] : memref<2x8x128xf32, #tpu.memory_space<vmem>>, vector<1x8x128xf32>
    %12 = vector.shape_cast %11 : vector<1x8x128xf32> to vector<8x128xf32>
    %13 = vector.extract_strided_slice %12 {offsets = [0, 0], sizes = [1, 32], strides = [1, 1]} : vector<8x128xf32> to vector<1x32xf32>
    %14 = vector.extract_strided_slice %12 {offsets = [1, 0], sizes = [1, 32], strides = [1, 1]} : vector<8x128xf32> to vector<1x32xf32>
    %15 = vector.extract_strided_slice %12 {offsets = [2, 0], sizes = [1, 64], strides = [1, 1]} : vector<8x128xf32> to vector<1x64xf32>
    %16 = vector.extract_strided_slice %12 {offsets = [3, 0], sizes = [1, 32], strides = [1, 1]} : vector<8x128xf32> to vector<1x32xf32>
    %17 = vector.extract_strided_slice %12 {offsets = [4, 0], sizes = [1, 32], strides = [1, 1]} : vector<8x128xf32> to vector<1x32xf32>
    %18 = vector.extract_strided_slice %12 {offsets = [5, 0], sizes = [1, 32], strides = [1, 1]} : vector<8x128xf32> to vector<1x32xf32>
    %19 = vector.extract_strided_slice %12 {offsets = [6, 0], sizes = [1, 32], strides = [1, 1]} : vector<8x128xf32> to vector<1x32xf32>
    %20 = vector.extract_strided_slice %12 {offsets = [7, 0], sizes = [1, 32], strides = [1, 1]} : vector<8x128xf32> to vector<1x32xf32>
    %cst_9 = arith.constant dense<0.000000e+00> : vector<2x32xf32>
    %21 = tpu.matmul %6, %9, %cst_9 {dimension_numbers = #tpu.dot_dimension_numbers<[1], [0], [0], [1], [0, 0, 1, 1], [], []>} : vector<2x32xf32>, vector<32x32xf32>, vector<2x32xf32> -> vector<2x32xf32>
    %22 = vector.broadcast %13 : vector<1x32xf32> to vector<2x32xf32>
    %23 = arith.addf %21, %22 : vector<2x32xf32>
    %cst_10 = arith.constant dense<0.000000e+00> : vector<2x32xf32>
    %24 = tpu.matmul %23, %10, %cst_10 {dimension_numbers = #tpu.dot_dimension_numbers<[1], [0], [0], [1], [0, 0, 1, 1], [], []>} : vector<2x32xf32>, vector<32x32xf32>, vector<2x32xf32> -> vector<2x32xf32>
    %25 = vector.broadcast %14 : vector<1x32xf32> to vector<2x32xf32>
    %26 = arith.addf %24, %25 : vector<2x32xf32>
    %27 = arith.addf %6, %26 : vector<2x32xf32>
    %cst_11 = arith.constant dense<0.000000e+00> : vector<2xf32>
    %28 = vector.multi_reduction <add>, %27, %cst_11 [1] : vector<2x32xf32> to vector<2xf32>
    %29 = vector.shape_cast %28 : vector<2xf32> to vector<2x1xf32>
    %cst_12 = arith.constant 3.200000e+01 : f32
    %30 = vector.broadcast %cst_12 : f32 to vector<2x1xf32>
    %31 = arith.divf %29, %30 : vector<2x1xf32>
    %32 = vector.broadcast %31 : vector<2x1xf32> to vector<2x32xf32>
    %33 = arith.subf %27, %32 : vector<2x32xf32>
    %34 = arith.mulf %33, %33 : vector<2x32xf32>
    %cst_13 = arith.constant dense<0.000000e+00> : vector<2xf32>
    %35 = vector.multi_reduction <add>, %34, %cst_13 [1] : vector<2x32xf32> to vector<2xf32>
    %36 = vector.shape_cast %35 : vector<2xf32> to vector<2x1xf32>
    %cst_14 = arith.constant 3.200000e+01 : f32
    %37 = vector.broadcast %cst_14 : f32 to vector<2x1xf32>
    %38 = arith.divf %36, %37 : vector<2x1xf32>
    %39 = vector.broadcast %31 : vector<2x1xf32> to vector<2x32xf32>
    %40 = arith.subf %27, %39 : vector<2x32xf32>
    %cst_15 = arith.constant 9.99999974E-6 : f32
    %41 = vector.broadcast %cst_15 : f32 to vector<2x1xf32>
    %42 = arith.addf %38, %41 : vector<2x1xf32>
    %43 = math.rsqrt %42 : vector<2x1xf32>
    %44 = vector.broadcast %43 : vector<2x1xf32> to vector<2x32xf32>
    %45 = arith.mulf %40, %44 : vector<2x32xf32>
    %46 = vector.broadcast %17 : vector<1x32xf32> to vector<2x32xf32>
    %47 = arith.mulf %45, %46 : vector<2x32xf32>
    %48 = vector.broadcast %18 : vector<1x32xf32> to vector<2x32xf32>
    %49 = arith.addf %47, %48 : vector<2x32xf32>
    %c0_16 = arith.constant 0 : index
    %c0_17 = arith.constant 0 : index
    %c0_18 = arith.constant 0 : index
    %50 = vector.load %arg2[%c0_16, %c0_17, %c0_18] : memref<2x32x64xf32, #tpu.memory_space<vmem>>, vector<1x32x64xf32>
    %51 = vector.shape_cast %50 : vector<1x32x64xf32> to vector<32x64xf32>
    %cst_19 = arith.constant dense<0.000000e+00> : vector<2x64xf32>
    %52 = tpu.matmul %49, %51, %cst_19 {dimension_numbers = #tpu.dot_dimension_numbers<[1], [0], [0], [1], [0, 0, 1, 1], [], []>} : vector<2x32xf32>, vector<32x64xf32>, vector<2x64xf32> -> vector<2x64xf32>
    %53 = vector.broadcast %15 : vector<1x64xf32> to vector<2x64xf32>
    %54 = arith.addf %52, %53 : vector<2x64xf32>
    %cst_20 = arith.constant 0.000000e+00 : f32
    %55 = vector.broadcast %cst_20 : f32 to vector<2x64xf32>
    %56 = arith.maximumf %54, %55 : vector<2x64xf32>
    %c0_21 = arith.constant 0 : index
    %c0_22 = arith.constant 0 : index
    %c0_23 = arith.constant 0 : index
    %57 = vector.load %arg3[%c0_21, %c0_22, %c0_23] : memref<2x64x32xf32, #tpu.memory_space<vmem>>, vector<1x64x32xf32>
    %58 = vector.shape_cast %57 : vector<1x64x32xf32> to vector<64x32xf32>
    %cst_24 = arith.constant dense<0.000000e+00> : vector<2x32xf32>
    %59 = tpu.matmul %56, %58, %cst_24 {dimension_numbers = #tpu.dot_dimension_numbers<[1], [0], [0], [1], [0, 0, 1, 1], [], []>} : vector<2x64xf32>, vector<64x32xf32>, vector<2x32xf32> -> vector<2x32xf32>
    %60 = vector.broadcast %16 : vector<1x32xf32> to vector<2x32xf32>
    %61 = arith.addf %59, %60 : vector<2x32xf32>
    %62 = arith.addf %49, %61 : vector<2x32xf32>
    %cst_25 = arith.constant dense<0.000000e+00> : vector<2xf32>
    %63 = vector.multi_reduction <add>, %62, %cst_25 [1] : vector<2x32xf32> to vector<2xf32>
    %64 = vector.shape_cast %63 : vector<2xf32> to vector<2x1xf32>
    %cst_26 = arith.constant 3.200000e+01 : f32
    %65 = vector.broadcast %cst_26 : f32 to vector<2x1xf32>
    %66 = arith.divf %64, %65 : vector<2x1xf32>
    %67 = vector.broadcast %66 : vector<2x1xf32> to vector<2x32xf32>
    %68 = arith.subf %62, %67 : vector<2x32xf32>
    %69 = arith.mulf %68, %68 : vector<2x32xf32>
    %cst_27 = arith.constant dense<0.000000e+00> : vector<2xf32>
    %70 = vector.multi_reduction <add>, %69, %cst_27 [1] : vector<2x32xf32> to vector<2xf32>
    %71 = vector.shape_cast %70 : vector<2xf32> to vector<2x1xf32>
    %cst_28 = arith.constant 3.200000e+01 : f32
    %72 = vector.broadcast %cst_28 : f32 to vector<2x1xf32>
    %73 = arith.divf %71, %72 : vector<2x1xf32>
    %74 = vector.broadcast %66 : vector<2x1xf32> to vector<2x32xf32>
    %75 = arith.subf %62, %74 : vector<2x32xf32>
    %cst_29 = arith.constant 9.99999974E-6 : f32
    %76 = vector.broadcast %cst_29 : f32 to vector<2x1xf32>
    %77 = arith.addf %73, %76 : vector<2x1xf32>
    %78 = math.rsqrt %77 : vector<2x1xf32>
    %79 = vector.broadcast %78 : vector<2x1xf32> to vector<2x32xf32>
    %80 = arith.mulf %75, %79 : vector<2x32xf32>
    %81 = vector.broadcast %19 : vector<1x32xf32> to vector<2x32xf32>
    %82 = arith.mulf %80, %81 : vector<2x32xf32>
    %83 = vector.broadcast %20 : vector<1x32xf32> to vector<2x32xf32>
    %84 = arith.addf %82, %83 : vector<2x32xf32>
    %c1 = arith.constant 1 : index
    %c0_30 = arith.constant 0 : index
    %c0_31 = arith.constant 0 : index
    %85 = vector.load %arg1[%c1, %c0_30, %c0_31] : memref<2x64x32xf32, #tpu.memory_space<vmem>>, vector<1x64x32xf32>
    %86 = vector.shape_cast %85 : vector<1x64x32xf32> to vector<64x32xf32>
    %87 = vector.extract_strided_slice %86 {offsets = [0, 0], sizes = [32, 32], strides = [1, 1]} : vector<64x32xf32> to vector<32x32xf32>
    %88 = vector.extract_strided_slice %86 {offsets = [32, 0], sizes = [32, 32], strides = [1, 1]} : vector<64x32xf32> to vector<32x32xf32>
    %c1_32 = arith.constant 1 : index
    %c0_33 = arith.constant 0 : index
    %c0_34 = arith.constant 0 : index
    %89 = vector.load %arg4[%c1_32, %c0_33, %c0_34] : memref<2x8x128xf32, #tpu.memory_space<vmem>>, vector<1x8x128xf32>
    %90 = vector.shape_cast %89 : vector<1x8x128xf32> to vector<8x128xf32>
    %91 = vector.extract_strided_slice %90 {offsets = [0, 0], sizes = [1, 32], strides = [1, 1]} : vector<8x128xf32> to vector<1x32xf32>
    %92 = vector.extract_strided_slice %90 {offsets = [1, 0], sizes = [1, 32], strides = [1, 1]} : vector<8x128xf32> to vector<1x32xf32>
    %93 = vector.extract_strided_slice %90 {offsets = [2, 0], sizes = [1, 64], strides = [1, 1]} : vector<8x128xf32> to vector<1x64xf32>
    %94 = vector.extract_strided_slice %90 {offsets = [3, 0], sizes = [1, 32], strides = [1, 1]} : vector<8x128xf32> to vector<1x32xf32>
    %95 = vector.extract_strided_slice %90 {offsets = [4, 0], sizes = [1, 32], strides = [1, 1]} : vector<8x128xf32> to vector<1x32xf32>
    %96 = vector.extract_strided_slice %90 {offsets = [5, 0], sizes = [1, 32], strides = [1, 1]} : vector<8x128xf32> to vector<1x32xf32>
    %97 = vector.extract_strided_slice %90 {offsets = [6, 0], sizes = [1, 32], strides = [1, 1]} : vector<8x128xf32> to vector<1x32xf32>
    %98 = vector.extract_strided_slice %90 {offsets = [7, 0], sizes = [1, 32], strides = [1, 1]} : vector<8x128xf32> to vector<1x32xf32>
    %cst_35 = arith.constant dense<0.000000e+00> : vector<2x32xf32>
    %99 = tpu.matmul %84, %87, %cst_35 {dimension_numbers = #tpu.dot_dimension_numbers<[1], [0], [0], [1], [0, 0, 1, 1], [], []>} : vector<2x32xf32>, vector<32x32xf32>, vector<2x32xf32> -> vector<2x32xf32>
    %100 = vector.broadcast %91 : vector<1x32xf32> to vector<2x32xf32>
    %101 = arith.addf %99, %100 : vector<2x32xf32>
    %cst_36 = arith.constant dense<0.000000e+00> : vector<2x32xf32>
    %102 = tpu.matmul %101, %88, %cst_36 {dimension_numbers = #tpu.dot_dimension_numbers<[1], [0], [0], [1], [0, 0, 1, 1], [], []>} : vector<2x32xf32>, vector<32x32xf32>, vector<2x32xf32> -> vector<2x32xf32>
    %103 = vector.broadcast %92 : vector<1x32xf32> to vector<2x32xf32>
    %104 = arith.addf %102, %103 : vector<2x32xf32>
    %105 = arith.addf %84, %104 : vector<2x32xf32>
    %cst_37 = arith.constant dense<0.000000e+00> : vector<2xf32>
    %106 = vector.multi_reduction <add>, %105, %cst_37 [1] : vector<2x32xf32> to vector<2xf32>
    %107 = vector.shape_cast %106 : vector<2xf32> to vector<2x1xf32>
    %cst_38 = arith.constant 3.200000e+01 : f32
    %108 = vector.broadcast %cst_38 : f32 to vector<2x1xf32>
    %109 = arith.divf %107, %108 : vector<2x1xf32>
    %110 = vector.broadcast %109 : vector<2x1xf32> to vector<2x32xf32>
    %111 = arith.subf %105, %110 : vector<2x32xf32>
    %112 = arith.mulf %111, %111 : vector<2x32xf32>
    %cst_39 = arith.constant dense<0.000000e+00> : vector<2xf32>
    %113 = vector.multi_reduction <add>, %112, %cst_39 [1] : vector<2x32xf32> to vector<2xf32>
    %114 = vector.shape_cast %113 : vector<2xf32> to vector<2x1xf32>
    %cst_40 = arith.constant 3.200000e+01 : f32
    %115 = vector.broadcast %cst_40 : f32 to vector<2x1xf32>
    %116 = arith.divf %114, %115 : vector<2x1xf32>
    %117 = vector.broadcast %109 : vector<2x1xf32> to vector<2x32xf32>
    %118 = arith.subf %105, %117 : vector<2x32xf32>
    %cst_41 = arith.constant 9.99999974E-6 : f32
    %119 = vector.broadcast %cst_41 : f32 to vector<2x1xf32>
    %120 = arith.addf %116, %119 : vector<2x1xf32>
    %121 = math.rsqrt %120 : vector<2x1xf32>
    %122 = vector.broadcast %121 : vector<2x1xf32> to vector<2x32xf32>
    %123 = arith.mulf %118, %122 : vector<2x32xf32>
    %124 = vector.broadcast %95 : vector<1x32xf32> to vector<2x32xf32>
    %125 = arith.mulf %123, %124 : vector<2x32xf32>
    %126 = vector.broadcast %96 : vector<1x32xf32> to vector<2x32xf32>
    %127 = arith.addf %125, %126 : vector<2x32xf32>
    %c1_42 = arith.constant 1 : index
    %c0_43 = arith.constant 0 : index
    %c0_44 = arith.constant 0 : index
    %128 = vector.load %arg2[%c1_42, %c0_43, %c0_44] : memref<2x32x64xf32, #tpu.memory_space<vmem>>, vector<1x32x64xf32>
    %129 = vector.shape_cast %128 : vector<1x32x64xf32> to vector<32x64xf32>
    %cst_45 = arith.constant dense<0.000000e+00> : vector<2x64xf32>
    %130 = tpu.matmul %127, %129, %cst_45 {dimension_numbers = #tpu.dot_dimension_numbers<[1], [0], [0], [1], [0, 0, 1, 1], [], []>} : vector<2x32xf32>, vector<32x64xf32>, vector<2x64xf32> -> vector<2x64xf32>
    %131 = vector.broadcast %93 : vector<1x64xf32> to vector<2x64xf32>
    %132 = arith.addf %130, %131 : vector<2x64xf32>
    %cst_46 = arith.constant 0.000000e+00 : f32
    %133 = vector.broadcast %cst_46 : f32 to vector<2x64xf32>
    %134 = arith.maximumf %132, %133 : vector<2x64xf32>
    %c1_47 = arith.constant 1 : index
    %c0_48 = arith.constant 0 : index
    %c0_49 = arith.constant 0 : index
    %135 = vector.load %arg3[%c1_47, %c0_48, %c0_49] : memref<2x64x32xf32, #tpu.memory_space<vmem>>, vector<1x64x32xf32>
    %136 = vector.shape_cast %135 : vector<1x64x32xf32> to vector<64x32xf32>
    %cst_50 = arith.constant dense<0.000000e+00> : vector<2x32xf32>
    %137 = tpu.matmul %134, %136, %cst_50 {dimension_numbers = #tpu.dot_dimension_numbers<[1], [0], [0], [1], [0, 0, 1, 1], [], []>} : vector<2x64xf32>, vector<64x32xf32>, vector<2x32xf32> -> vector<2x32xf32>
    %138 = vector.broadcast %94 : vector<1x32xf32> to vector<2x32xf32>
    %139 = arith.addf %137, %138 : vector<2x32xf32>
    %140 = arith.addf %127, %139 : vector<2x32xf32>
    %cst_51 = arith.constant dense<0.000000e+00> : vector<2xf32>
    %141 = vector.multi_reduction <add>, %140, %cst_51 [1] : vector<2x32xf32> to vector<2xf32>
    %142 = vector.shape_cast %141 : vector<2xf32> to vector<2x1xf32>
    %cst_52 = arith.constant 3.200000e+01 : f32
    %143 = vector.broadcast %cst_52 : f32 to vector<2x1xf32>
    %144 = arith.divf %142, %143 : vector<2x1xf32>
    %145 = vector.broadcast %144 : vector<2x1xf32> to vector<2x32xf32>
    %146 = arith.subf %140, %145 : vector<2x32xf32>
    %147 = arith.mulf %146, %146 : vector<2x32xf32>
    %cst_53 = arith.constant dense<0.000000e+00> : vector<2xf32>
    %148 = vector.multi_reduction <add>, %147, %cst_53 [1] : vector<2x32xf32> to vector<2xf32>
    %149 = vector.shape_cast %148 : vector<2xf32> to vector<2x1xf32>
    %cst_54 = arith.constant 3.200000e+01 : f32
    %150 = vector.broadcast %cst_54 : f32 to vector<2x1xf32>
    %151 = arith.divf %149, %150 : vector<2x1xf32>
    %152 = vector.broadcast %144 : vector<2x1xf32> to vector<2x32xf32>
    %153 = arith.subf %140, %152 : vector<2x32xf32>
    %cst_55 = arith.constant 9.99999974E-6 : f32
    %154 = vector.broadcast %cst_55 : f32 to vector<2x1xf32>
    %155 = arith.addf %151, %154 : vector<2x1xf32>
    %156 = math.rsqrt %155 : vector<2x1xf32>
    %157 = vector.broadcast %156 : vector<2x1xf32> to vector<2x32xf32>
    %158 = arith.mulf %153, %157 : vector<2x32xf32>
    %159 = vector.broadcast %97 : vector<1x32xf32> to vector<2x32xf32>
    %160 = arith.mulf %158, %159 : vector<2x32xf32>
    %161 = vector.broadcast %98 : vector<1x32xf32> to vector<2x32xf32>
    %162 = arith.addf %160, %161 : vector<2x32xf32>
    %c0_56 = arith.constant 0 : index
    %c0_57 = arith.constant 0 : index
    %163 = vector.load %arg9[%c0_56, %c0_57] : memref<2x32xf32, #tpu.memory_space<vmem>>, vector<2x32xf32>
    tpu.vector_store %arg9[%c0_56, %c0_57], %162 {strides = array<i32>} : memref<2x32xf32, #tpu.memory_space<vmem>>, vector<2x32xf32>,
    %c0_58 = arith.constant 0 : index
    %c0_59 = arith.constant 0 : index
    %164 = vector.load %arg5[%c0_58, %c0_59] : memref<64x32xf32, #tpu.memory_space<vmem>>, vector<64x32xf32>
    %165 = vector.extract_strided_slice %164 {offsets = [0, 0], sizes = [32, 32], strides = [1, 1]} : vector<64x32xf32> to vector<32x32xf32>
    %166 = vector.extract_strided_slice %164 {offsets = [32, 0], sizes = [32, 32], strides = [1, 1]} : vector<64x32xf32> to vector<32x32xf32>
    %167 = vector.extract_strided_slice %0 {offsets = [0, 0], sizes = [1, 32], strides = [1, 1]} : vector<8x128xf32> to vector<1x32xf32>
    %168 = vector.extract_strided_slice %0 {offsets = [1, 0], sizes = [1, 32], strides = [1, 1]} : vector<8x128xf32> to vector<1x32xf32>
    %169 = vector.extract_strided_slice %0 {offsets = [2, 0], sizes = [1, 64], strides = [1, 1]} : vector<8x128xf32> to vector<1x64xf32>
    %170 = vector.extract_strided_slice %0 {offsets = [3, 0], sizes = [1, 128], strides = [1, 1]} : vector<8x128xf32> to vector<1x128xf32>
    %cst_60 = arith.constant dense<0.000000e+00> : vector<2x32xf32>
    %171 = tpu.matmul %162, %165, %cst_60 {dimension_numbers = #tpu.dot_dimension_numbers<[1], [0], [0], [1], [0, 0, 1, 1], [], []>} : vector<2x32xf32>, vector<32x32xf32>, vector<2x32xf32> -> vector<2x32xf32>
    %172 = vector.broadcast %167 : vector<1x32xf32> to vector<2x32xf32>
    %173 = arith.addf %171, %172 : vector<2x32xf32>
    %cst_61 = arith.constant dense<0.000000e+00> : vector<2x32xf32>
    %174 = tpu.matmul %173, %166, %cst_61 {dimension_numbers = #tpu.dot_dimension_numbers<[1], [0], [0], [1], [0, 0, 1, 1], [], []>} : vector<2x32xf32>, vector<32x32xf32>, vector<2x32xf32> -> vector<2x32xf32>
    %175 = vector.broadcast %168 : vector<1x32xf32> to vector<2x32xf32>
    %176 = arith.addf %174, %175 : vector<2x32xf32>
    %c0_62 = arith.constant 0 : index
    %c0_63 = arith.constant 0 : index
    %177 = vector.load %arg6[%c0_62, %c0_63] : memref<32x64xf32, #tpu.memory_space<vmem>>, vector<32x64xf32>
    %cst_64 = arith.constant dense<0.000000e+00> : vector<2x64xf32>
    %178 = tpu.matmul %176, %177, %cst_64 {dimension_numbers = #tpu.dot_dimension_numbers<[1], [0], [0], [1], [0, 0, 1, 1], [], []>} : vector<2x32xf32>, vector<32x64xf32>, vector<2x64xf32> -> vector<2x64xf32>
    %179 = vector.broadcast %169 : vector<1x64xf32> to vector<2x64xf32>
    %180 = arith.addf %178, %179 : vector<2x64xf32>
    %cst_65 = arith.constant 0.000000e+00 : f32
    %181 = vector.broadcast %cst_65 : f32 to vector<2x64xf32>
    %182 = arith.maximumf %180, %181 : vector<2x64xf32>
    %c0_66 = arith.constant 0 : index
    %c0_67 = arith.constant 0 : index
    %183 = vector.load %arg7[%c0_66, %c0_67] : memref<64x128xf32, #tpu.memory_space<vmem>>, vector<64x128xf32>
    %cst_68 = arith.constant dense<0.000000e+00> : vector<2x128xf32>
    %184 = tpu.matmul %182, %183, %cst_68 {dimension_numbers = #tpu.dot_dimension_numbers<[1], [0], [0], [1], [0, 0, 1, 1], [], []>} : vector<2x64xf32>, vector<64x128xf32>, vector<2x128xf32> -> vector<2x128xf32>
    %185 = vector.broadcast %170 : vector<1x128xf32> to vector<2x128xf32>
    %186 = arith.addf %184, %185 : vector<2x128xf32>
    %c0_69 = arith.constant 0 : index
    %c0_70 = arith.constant 0 : index
    %187 = vector.load %arg10[%c0_69, %c0_70] : memref<2x128xf32, #tpu.memory_space<vmem>>, vector<2x128xf32>
    tpu.vector_store %arg10[%c0_69, %c0_70], %186 {strides = array<i32>} : memref<2x128xf32, #tpu.memory_space<vmem>>, vector<2x128xf32>,
    return
  }
}

</mosaic_0001>

<llo_original>
// kernel: tpu_custom_call.1
$region0: #{tpu_custom_call.1}
  #allocation0 [shape = 'u32[]', space=smem, size = 0x4, offset = 0x4, fixed_abs, tag = 'smem constant byte address 0x4 - core index']
  #allocation1 [shape = 'u32[144,128]{1,0:T(1,128)}', space=vmem, size = 0x12000, scoped, tag = 'internal scratch']
  %s0 = inlined_call_operand.vmem [shape: f32[2,32], index: 0, kind: input, shape index: {}]
  %s1 = inlined_call_operand.vmem [shape: f32[2,64,32], index: 1, kind: input, shape index: {}]
  %s2 = inlined_call_operand.vmem [shape: f32[2,32,64], index: 2, kind: input, shape index: {}]
  %s3 = inlined_call_operand.vmem [shape: f32[2,64,32], index: 3, kind: input, shape index: {}]
  %s4 = inlined_call_operand.vmem [shape: f32[2,8,128], index: 4, kind: input, shape index: {}]
  %s5 = inlined_call_operand.vmem [shape: f32[64,32], index: 5, kind: input, shape index: {}]
  %s6 = inlined_call_operand.vmem [shape: f32[32,64], index: 6, kind: input, shape index: {}]
  %s7 = inlined_call_operand.vmem [shape: f32[64,128], index: 7, kind: input, shape index: {}]
  %s8 = inlined_call_operand.vmem [shape: f32[8,128], index: 8, kind: input, shape index: {}]
  %s9 = inlined_call_operand.hbm [shape: f32[2,32], index: 9, kind: output, shape index: {0}]
  %s10 = inlined_call_operand.hbm [shape: f32[2,128], index: 10, kind: output, shape index: {1}]
  %11 = xla_tuple %s9, %s10
  %s12 = sld [smem:[#allocation0]]
  $region54: #{tpu_custom_call.1} parent=0
    _
  %s14 = ssub.s32 1, %s12
  %s15 = scalar_select 0, %s14, %s12
  $region1: #{tpu_custom_call.1} parent=0
    #allocation2 [shape = 'u8[1024]{0}', space=vmem, size = 0x400, scoped, tag = 'output window, operand 0, single buffered']
    #allocation3 [shape = 's32[1]{0}', space=sflag, size = 0x4, scoped, tag = 'scoped memory for tpu_custom_call.1']
    #allocation4 [shape = 'u8[1024]{0}', space=vmem, size = 0x400, scoped, tag = 'output window, operand 1, single buffered']
    #allocation5 [shape = 's32[1]{0}', space=sflag, size = 0x4, scoped, tag = 'scoped memory for tpu_custom_call.1']
    %16 = vsyncpa [#allocation3], 0
    %17 = vsyncpa [#allocation5], 0
    // Predicated region
    $region2: #{tpu_custom_call.1} parent=1 // pred_check
      _
    $region3: #{tpu_custom_call.1} parent=1 // pred_check_branch
      %19 = sbr.rel (0) target = $region5
    $region4: #{tpu_custom_call.1} parent=1 // pred_region
      _
    $region5: #{tpu_custom_call.1} parent=1 // pred_fallthru
      _
    // Predicated region
    $region6: #{tpu_custom_call.1} parent=1 // pred_check
      _
    $region7: #{tpu_custom_call.1} parent=1 // pred_check_branch
      %21 = sbr.rel (0) target = $region9
    $region8: #{tpu_custom_call.1} parent=1 // pred_region
      _
    $region9: #{tpu_custom_call.1} parent=1 // pred_fallthru
      _
    // Predicated region
    $region10: #{tpu_custom_call.1} parent=1 // pred_check
      _
    $region11: #{tpu_custom_call.1} parent=1 // pred_check_branch
      %23 = sbr.rel (0) target = $region13
    $region12: #{tpu_custom_call.1} parent=1 // pred_region
      _
    $region13: #{tpu_custom_call.1} parent=1 // pred_fallthru
      _
    // Predicated region
    $region14: #{tpu_custom_call.1} parent=1 // pred_check
      _
    $region15: #{tpu_custom_call.1} parent=1 // pred_check_branch
      %25 = sbr.rel (0) target = $region17
    $region16: #{tpu_custom_call.1} parent=1 // pred_region
      _
    $region17: #{tpu_custom_call.1} parent=1 // pred_fallthru
      _
    // Predicated region
    $region18: #{tpu_custom_call.1} parent=1 // pred_check
      _
    $region19: #{tpu_custom_call.1} parent=1 // pred_check_branch
      %27 = sbr.rel (0) target = $region21
    $region20: #{tpu_custom_call.1} parent=1 // pred_region
      _
    $region21: #{tpu_custom_call.1} parent=1 // pred_fallthru
      _
    // Predicated region
    $region22: #{tpu_custom_call.1} parent=1 // pred_check
      _
    $region23: #{tpu_custom_call.1} parent=1 // pred_check_branch
      %29 = sbr.rel (0) target = $region25
    $region24: #{tpu_custom_call.1} parent=1 // pred_region
      _
    $region25: #{tpu_custom_call.1} parent=1 // pred_fallthru
      _
    // Predicated region
    $region26: #{tpu_custom_call.1} parent=1 // pred_check
      _
    $region27: #{tpu_custom_call.1} parent=1 // pred_check_branch
      %31 = sbr.rel (0) target = $region29
    $region28: #{tpu_custom_call.1} parent=1 // pred_region
      _
    $region29: #{tpu_custom_call.1} parent=1 // pred_fallthru
      _
    // Predicated region
    $region30: #{tpu_custom_call.1} parent=1 // pred_check
      _
    $region31: #{tpu_custom_call.1} parent=1 // pred_check_branch
      %33 = sbr.rel (0) target = $region33
    $region32: #{tpu_custom_call.1} parent=1 // pred_region
      _
    $region33: #{tpu_custom_call.1} parent=1 // pred_fallthru
      _
    // Predicated region
    $region34: #{tpu_custom_call.1} parent=1 // pred_check
      _
    $region35: #{tpu_custom_call.1} parent=1 // pred_check_branch
      %35 = sbr.rel (0) target = $region37
    $region36: #{tpu_custom_call.1} parent=1 // pred_region
      _
    $region37: #{tpu_custom_call.1} parent=1 // pred_fallthru
      _
    %v36 = vld [vmem:[%s8] sm:$0xff]
    %v37 = vld [vmem:[%s0] sm:$0x3]
    %v38 = vmul.f32 %v37, 5.656854
    %v39 = vlaneseq
    %v40 = vshrl.u32 %v39, 7
    %v41 = vsub.s32 4, %v40
    %v42 = vrot.slane %v36, %v41
    %v43 = vadd.f32 %v38, %v42
    %v44 = vld [vmem:[%s1] sm:$0xff]
    %v45 = vld [vmem:[%s1 + $0x8] sm:$0xff]
    %v46 = vld [vmem:[%s1 + $0x10] sm:$0xff]
    %v47 = vld [vmem:[%s1 + $0x18] sm:$0xff]
    %v48 = vld [vmem:[%s1 + $0x20] sm:$0xff]
    %v49 = vld [vmem:[%s1 + $0x28] sm:$0xff]
    %v50 = vld [vmem:[%s1 + $0x30] sm:$0xff]
    %v51 = vld [vmem:[%s1 + $0x38] sm:$0xff]
    %v52 = vld [vmem:[%s4] sm:$0xff]
    %v53 = vlaneseq
    %v54 = vshrl.u32 %v53, 7
    %v55 = vsub.s32 0, %v54
    %v56 = vrot.slane %v52, %v55
    %vm57 = vcmask 261120
    %v59 = vsel %vm57, %v43, 0
    %61 = vmatprep.subr.mxu0 0.0
    %62 = vmatpush1.msra.mxu0 %v44
    %63 = vmatprep.subr.mxu0 0.0
    %64 = vmatpush1.msra.mxu0 %v45
    %65 = vmatprep.subr.mxu0 0.0
    %66 = vmatpush1.msra.mxu0 %v46
    %67 = vmatprep.subr.mxu0 0.0
    %68 = vmatpush1.msra.mxu0 %v47
    %69 = vmatprep.subr.mxu0 0.0
    %70 = vmatpush1.msra.mxu0 0.0
    %71 = vmatprep.subr.mxu0 0.0
    %72 = vmatpush1.msra.mxu0 0.0
    %73 = vmatprep.subr.mxu0 0.0
    %74 = vmatpush1.msra.mxu0 0.0
    %75 = vmatprep.subr.mxu0 0.0
    %76 = vmatpush1.msra.mxu0 0.0
    %77 = vmatprep.subr.mxu0 0.0
    %78 = vmatpush1.msra.mxu0 0.0
    %79 = vmatprep.subr.mxu0 0.0
    %80 = vmatpush1.msra.mxu0 0.0
    %81 = vmatprep.subr.mxu0 0.0
    %82 = vmatpush1.msra.mxu0 0.0
    %83 = vmatprep.subr.mxu0 0.0
    %84 = vmatpush1.msra.mxu0 0.0
    %85 = vmatprep.subr.mxu0 0.0
    %86 = vmatpush1.msra.mxu0 0.0
    %87 = vmatprep.subr.mxu0 0.0
    %88 = vmatpush1.msra.mxu0 0.0
    %89 = vmatprep.subr.mxu0 0.0
    %90 = vmatpush1.msra.mxu0 0.0
    %91 = vmatprep.subr.mxu0 0.0
    %92 = vmatpush1.msra.mxu0 0.0
    %93 = vmatprep.subr.mxu0 0.0
    %94 = vmatpush1.msra.mxu0 0.0
    %95 = vmatprep.subr.mxu0 0.0
    %96 = vmatpush1.msra.mxu0 0.0
    %97 = vmatprep.subr.mxu0 0.0
    %98 = vmatpush1.msra.mxu0 0.0
    %99 = vmatprep.subr.mxu0 0.0
    %100 = vmatpush1.msra.mxu0 0.0
    %101 = vmatprep.subr.mxu0 0.0
    %102 = vmatpush1.msra.mxu0 0.0
    %103 = vmatprep.subr.mxu0 0.0
    %104 = vmatpush1.msra.mxu0 0.0
    %105 = vmatprep.subr.mxu0 0.0
    %106 = vmatpush1.msra.mxu0 0.0
    %107 = vmatprep.subr.mxu0 0.0
    %108 = vmatpush1.msra.mxu0 0.0
    %109 = vmatprep.subr.mxu0 0.0
    %110 = vmatpush1.msra.mxu0 0.0
    %111 = vmatprep.subr.mxu0 0.0
    %112 = vmatpush1.msra.mxu0 0.0
    %113 = vmatprep.subr.mxu0 0.0
    %114 = vmatpush1.msra.mxu0 0.0
    %115 = vmatprep.subr.mxu0 0.0
    %116 = vmatpush1.msra.mxu0 0.0
    %117 = vmatprep.subr.mxu0 0.0
    %118 = vmatpush1.msra.mxu0 0.0
    %119 = vmatprep.subr.mxu0 0.0
    %120 = vmatpush1.msra.mxu0 0.0
    %121 = vmatprep.subr.mxu0 0.0
    %122 = vmatpush1.msra.mxu0 0.0
    %123 = vmatprep.subr.mxu0 0.0
    %124 = vmatpush1.msra.mxu0 0.0
    %125 = vmatprep.mubr.f32.mxu0 0.0
    %126 = vmatmul.mubr.f32.gmra.mrb[0].mxu0 %v59
    %v127 = vpop.f32.mrb[0].mxu0
    %v128 = vadd.f32 %v56, %v127
    %v129 = vpop.f32.mrb[0].mxu0
    %130 = vdwg.mxu0
    %v131 = vlaneseq
    %v132 = vshrl.u32 %v131, 7
    %v133 = vsub.s32 1, %v132
    %v134 = vrot.slane %v52, %v133
    %v136 = vsel %vm57, %v128, 0
    %138 = vmatprep.subr.mxu0 0.0
    %139 = vmatpush1.msra.mxu0 %v48
    %140 = vmatprep.subr.mxu0 0.0
    %141 = vmatpush1.msra.mxu0 %v49
    %142 = vmatprep.subr.mxu0 0.0
    %143 = vmatpush1.msra.mxu0 %v50
    %144 = vmatprep.subr.mxu0 0.0
    %145 = vmatpush1.msra.mxu0 %v51
    %146 = vmatprep.subr.mxu0 0.0
    %147 = vmatpush1.msra.mxu0 0.0
    %148 = vmatprep.subr.mxu0 0.0
    %149 = vmatpush1.msra.mxu0 0.0
    %150 = vmatprep.subr.mxu0 0.0
    %151 = vmatpush1.msra.mxu0 0.0
    %152 = vmatprep.subr.mxu0 0.0
    %153 = vmatpush1.msra.mxu0 0.0
    %154 = vmatprep.subr.mxu0 0.0
    %155 = vmatpush1.msra.mxu0 0.0
    %156 = vmatprep.subr.mxu0 0.0
    %157 = vmatpush1.msra.mxu0 0.0
    %158 = vmatprep.subr.mxu0 0.0
    %159 = vmatpush1.msra.mxu0 0.0
    %160 = vmatprep.subr.mxu0 0.0
    %161 = vmatpush1.msra.mxu0 0.0
    %162 = vmatprep.subr.mxu0 0.0
    %163 = vmatpush1.msra.mxu0 0.0
    %164 = vmatprep.subr.mxu0 0.0
    %165 = vmatpush1.msra.mxu0 0.0
    %166 = vmatprep.subr.mxu0 0.0
    %167 = vmatpush1.msra.mxu0 0.0
    %168 = vmatprep.subr.mxu0 0.0
    %169 = vmatpush1.msra.mxu0 0.0
    %170 = vmatprep.subr.mxu0 0.0
    %171 = vmatpush1.msra.mxu0 0.0
    %172 = vmatprep.subr.mxu0 0.0
    %173 = vmatpush1.msra.mxu0 0.0
    %174 = vmatprep.subr.mxu0 0.0
    %175 = vmatpush1.msra.mxu0 0.0
    %176 = vmatprep.subr.mxu0 0.0
    %177 = vmatpush1.msra.mxu0 0.0
    %178 = vmatprep.subr.mxu0 0.0
    %179 = vmatpush1.msra.mxu0 0.0
    %180 = vmatprep.subr.mxu0 0.0
    %181 = vmatpush1.msra.mxu0 0.0
    %182 = vmatprep.subr.mxu0 0.0
    %183 = vmatpush1.msra.mxu0 0.0
    %184 = vmatprep.subr.mxu0 0.0
    %185 = vmatpush1.msra.mxu0 0.0
    %186 = vmatprep.subr.mxu0 0.0
    %187 = vmatpush1.msra.mxu0 0.0
    %188 = vmatprep.subr.mxu0 0.0
    %189 = vmatpush1.msra.mxu0 0.0
    %190 = vmatprep.subr.mxu0 0.0
    %191 = vmatpush1.msra.mxu0 0.0
    %192 = vmatprep.subr.mxu0 0.0
    %193 = vmatpush1.msra.mxu0 0.0
    %194 = vmatprep.subr.mxu0 0.0
    %195 = vmatpush1.msra.mxu0 0.0
    %196 = vmatprep.subr.mxu0 0.0
    %197 = vmatpush1.msra.mxu0 0.0
    %198 = vmatprep.subr.mxu0 0.0
    %199 = vmatpush1.msra.mxu0 0.0
    %200 = vmatprep.subr.mxu0 0.0
    %201 = vmatpush1.msra.mxu0 0.0
    %202 = vmatprep.mubr.f32.mxu0 0.0
    %203 = vmatmul.mubr.f32.gmra.mrb[0].mxu0 %v136
    %v204 = vpop.f32.mrb[0].mxu0
    %v205 = vadd.f32 %v134, %v204
    %v206 = vpop.f32.mrb[0].mxu0
    %207 = vdwg.mxu0
    %v208 = vadd.f32 %v43, %v205
    %vm209 = vcmask 254976
    %v210 = vsel %vm209, %v208, 0.0
    %211 = vadd.xlane.f32.xlu0 %v210
    %v212 = vpop.xlane.xlu0 %211
    %v213 = vrcp.pop 32.0
    %v214 = vmul.f32 %v212, %v213
    %v215 = vsub.f32 %v208, %v214
    %v216 = vmul.f32 %v215, %v215
    %v217 = vsel %vm209, %v216, 0.0
    %218 = vadd.xlane.f32.xlu0 %v217
    %v219 = vpop.xlane.xlu0 %218
    %v220 = vmul.f32 %v219, %v213
    %v221 = vadd.f32 %v220, 1e-05
    %v222 = vrsqrt.pop %v221
    %v223 = vmul.f32 %v215, %v222
    %v224 = vlaneseq
    %v225 = vshrl.u32 %v224, 7
    %v226 = vsub.s32 4, %v225
    %v227 = vrot.slane %v52, %v226
    %v228 = vmul.f32 %v223, %v227
    %v229 = vlaneseq
    %v230 = vshrl.u32 %v229, 7
    %v231 = vsub.s32 5, %v230
    %v232 = vrot.slane %v52, %v231
    %v233 = vadd.f32 %v228, %v232
    %v234 = vld [vmem:[%s2] sm:$0xff]
    %v235 = vld [vmem:[%s2 + $0x8] sm:$0xff]
    %v236 = vld [vmem:[%s2 + $0x10] sm:$0xff]
    %v237 = vld [vmem:[%s2 + $0x18] sm:$0xff]
    %v238 = vlaneseq
    %v239 = vshrl.u32 %v238, 7
    %v240 = vsub.s32 2, %v239
    %v241 = vrot.slane %v52, %v240
    %v243 = vsel %vm57, %v233, 0
    %245 = vmatprep.subr.mxu0 0.0
    %246 = vmatpush1.msra.mxu0 %v234
    %247 = vmatprep.subr.mxu0 0.0
    %248 = vmatpush1.msra.mxu0 %v235
    %249 = vmatprep.subr.mxu0 0.0
    %250 = vmatpush1.msra.mxu0 %v236
    %251 = vmatprep.subr.mxu0 0.0
    %252 = vmatpush1.msra.mxu0 %v237
    %253 = vmatprep.subr.mxu0 0.0
    %254 = vmatpush1.msra.mxu0 0.0
    %255 = vmatprep.subr.mxu0 0.0
    %256 = vmatpush1.msra.mxu0 0.0
    %257 = vmatprep.subr.mxu0 0.0
    %258 = vmatpush1.msra.mxu0 0.0
    %259 = vmatprep.subr.mxu0 0.0
    %260 = vmatpush1.msra.mxu0 0.0
    %261 = vmatprep.subr.mxu0 0.0
    %262 = vmatpush1.msra.mxu0 0.0
    %263 = vmatprep.subr.mxu0 0.0
    %264 = vmatpush1.msra.mxu0 0.0
    %265 = vmatprep.subr.mxu0 0.0
    %266 = vmatpush1.msra.mxu0 0.0
    %267 = vmatprep.subr.mxu0 0.0
    %268 = vmatpush1.msra.mxu0 0.0
    %269 = vmatprep.subr.mxu0 0.0
    %270 = vmatpush1.msra.mxu0 0.0
    %271 = vmatprep.subr.mxu0 0.0
    %272 = vmatpush1.msra.mxu0 0.0
    %273 = vmatprep.subr.mxu0 0.0
    %274 = vmatpush1.msra.mxu0 0.0
    %275 = vmatprep.subr.mxu0 0.0
    %276 = vmatpush1.msra.mxu0 0.0
    %277 = vmatprep.subr.mxu0 0.0
    %278 = vmatpush1.msra.mxu0 0.0
    %279 = vmatprep.subr.mxu0 0.0
    %280 = vmatpush1.msra.mxu0 0.0
    %281 = vmatprep.subr.mxu0 0.0
    %282 = vmatpush1.msra.mxu0 0.0
    %283 = vmatprep.subr.mxu0 0.0
    %284 = vmatpush1.msra.mxu0 0.0
    %285 = vmatprep.subr.mxu0 0.0
    %286 = vmatpush1.msra.mxu0 0.0
    %287 = vmatprep.subr.mxu0 0.0
    %288 = vmatpush1.msra.mxu0 0.0
    %289 = vmatprep.subr.mxu0 0.0
    %290 = vmatpush1.msra.mxu0 0.0
    %291 = vmatprep.subr.mxu0 0.0
    %292 = vmatpush1.msra.mxu0 0.0
    %293 = vmatprep.subr.mxu0 0.0
    %294 = vmatpush1.msra.mxu0 0.0
    %295 = vmatprep.subr.mxu0 0.0
    %296 = vmatpush1.msra.mxu0 0.0
    %297 = vmatprep.subr.mxu0 0.0
    %298 = vmatpush1.msra.mxu0 0.0
    %299 = vmatprep.subr.mxu0 0.0
    %300 = vmatpush1.msra.mxu0 0.0
    %301 = vmatprep.subr.mxu0 0.0
    %302 = vmatpush1.msra.mxu0 0.0
    %303 = vmatprep.subr.mxu0 0.0
    %304 = vmatpush1.msra.mxu0 0.0
    %305 = vmatprep.subr.mxu0 0.0
    %306 = vmatpush1.msra.mxu0 0.0
    %307 = vmatprep.subr.mxu0 0.0
    %308 = vmatpush1.msra.mxu0 0.0
    %309 = vmatprep.mubr.f32.mxu0 0.0
    %310 = vmatmul.mubr.f32.gmra.mrb[0].mxu0 %v243
    %v311 = vpop.f32.mrb[0].mxu0
    %v312 = vadd.f32 %v241, %v311
    %v313 = vpop.f32.mrb[0].mxu0
    %314 = vdwg.mxu0
    %v315 = vmax.f32 %v312, 0.0
    %v316 = vld [vmem:[%s3] sm:$0xff]
    %v317 = vld [vmem:[%s3 + $0x8] sm:$0xff]
    %v318 = vld [vmem:[%s3 + $0x10] sm:$0xff]
    %v319 = vld [vmem:[%s3 + $0x18] sm:$0xff]
    %v320 = vld [vmem:[%s3 + $0x20] sm:$0xff]
    %v321 = vld [vmem:[%s3 + $0x28] sm:$0xff]
    %v322 = vld [vmem:[%s3 + $0x30] sm:$0xff]
    %v323 = vld [vmem:[%s3 + $0x38] sm:$0xff]
    %v324 = vlaneseq
    %v325 = vshrl.u32 %v324, 7
    %v326 = vsub.s32 3, %v325
    %v327 = vrot.slane %v52, %v326
    %vm328 = vcmask 523264
    %v330 = vsel %vm328, %v315, 0
    %332 = vmatprep.subr.mxu0 0.0
    %333 = vmatpush1.msra.mxu0 %v316
    %334 = vmatprep.subr.mxu0 0.0
    %335 = vmatpush1.msra.mxu0 %v317
    %336 = vmatprep.subr.mxu0 0.0
    %337 = vmatpush1.msra.mxu0 %v318
    %338 = vmatprep.subr.mxu0 0.0
    %339 = vmatpush1.msra.mxu0 %v319
    %340 = vmatprep.subr.mxu0 0.0
    %341 = vmatpush1.msra.mxu0 %v320
    %342 = vmatprep.subr.mxu0 0.0
    %343 = vmatpush1.msra.mxu0 %v321
    %344 = vmatprep.subr.mxu0 0.0
    %345 = vmatpush1.msra.mxu0 %v322
    %346 = vmatprep.subr.mxu0 0.0
    %347 = vmatpush1.msra.mxu0 %v323
    %348 = vmatprep.subr.mxu0 0.0
    %349 = vmatpush1.msra.mxu0 0.0
    %350 = vmatprep.subr.mxu0 0.0
    %351 = vmatpush1.msra.mxu0 0.0
    %352 = vmatprep.subr.mxu0 0.0
    %353 = vmatpush1.msra.mxu0 0.0
    %354 = vmatprep.subr.mxu0 0.0
    %355 = vmatpush1.msra.mxu0 0.0
    %356 = vmatprep.subr.mxu0 0.0
    %357 = vmatpush1.msra.mxu0 0.0
    %358 = vmatprep.subr.mxu0 0.0
    %359 = vmatpush1.msra.mxu0 0.0
    %360 = vmatprep.subr.mxu0 0.0
    %361 = vmatpush1.msra.mxu0 0.0
    %362 = vmatprep.subr.mxu0 0.0
    %363 = vmatpush1.msra.mxu0 0.0
    %364 = vmatprep.subr.mxu0 0.0
    %365 = vmatpush1.msra.mxu0 0.0
    %366 = vmatprep.subr.mxu0 0.0
    %367 = vmatpush1.msra.mxu0 0.0
    %368 = vmatprep.subr.mxu0 0.0
    %369 = vmatpush1.msra.mxu0 0.0
    %370 = vmatprep.subr.mxu0 0.0
    %371 = vmatpush1.msra.mxu0 0.0
    %372 = vmatprep.subr.mxu0 0.0
    %373 = vmatpush1.msra.mxu0 0.0
    %374 = vmatprep.subr.mxu0 0.0
    %375 = vmatpush1.msra.mxu0 0.0
    %376 = vmatprep.subr.mxu0 0.0
    %377 = vmatpush1.msra.mxu0 0.0
    %378 = vmatprep.subr.mxu0 0.0
    %379 = vmatpush1.msra.mxu0 0.0
    %380 = vmatprep.subr.mxu0 0.0
    %381 = vmatpush1.msra.mxu0 0.0
    %382 = vmatprep.subr.mxu0 0.0
    %383 = vmatpush1.msra.mxu0 0.0
    %384 = vmatprep.subr.mxu0 0.0
    %385 = vmatpush1.msra.mxu0 0.0
    %386 = vmatprep.subr.mxu0 0.0
    %387 = vmatpush1.msra.mxu0 0.0
    %388 = vmatprep.subr.mxu0 0.0
    %389 = vmatpush1.msra.mxu0 0.0
    %390 = vmatprep.subr.mxu0 0.0
    %391 = vmatpush1.msra.mxu0 0.0
    %392 = vmatprep.subr.mxu0 0.0
    %393 = vmatpush1.msra.mxu0 0.0
    %394 = vmatprep.subr.mxu0 0.0
    %395 = vmatpush1.msra.mxu0 0.0
    %396 = vmatprep.mubr.f32.mxu0 0.0
    %397 = vmatmul.mubr.f32.gmra.mrb[0].mxu0 %v330
    %v398 = vpop.f32.mrb[0].mxu0
    %v399 = vadd.f32 %v327, %v398
    %v400 = vpop.f32.mrb[0].mxu0
    %401 = vdwg.mxu0
    %v402 = vadd.f32 %v233, %v399
    %v403 = vsel %vm209, %v402, 0.0
    %404 = vadd.xlane.f32.xlu0 %v403
    %v405 = vpop.xlane.xlu0 %404
    %v406 = vmul.f32 %v405, %v213
    %v407 = vsub.f32 %v402, %v406
    %v408 = vmul.f32 %v407, %v407
    %v409 = vsel %vm209, %v408, 0.0
    %410 = vadd.xlane.f32.xlu0 %v409
    %v411 = vpop.xlane.xlu0 %410
    %v412 = vmul.f32 %v411, %v213
    %v413 = vadd.f32 %v412, 1e-05
    %v414 = vrsqrt.pop %v413
    %v415 = vmul.f32 %v407, %v414
    %v416 = vlaneseq
    %v417 = vshrl.u32 %v416, 7
    %v418 = vsub.s32 6, %v417
    %v419 = vrot.slane %v52, %v418
    %v420 = vmul.f32 %v415, %v419
    %v421 = vlaneseq
    %v422 = vshrl.u32 %v421, 7
    %v423 = vsub.s32 7, %v422
    %v424 = vrot.slane %v52, %v423
    %v425 = vadd.f32 %v420, %v424
    %s426 = scalar_lea.vmem %s1, 64
    %v427 = vld [vmem:[%s426] sm:$0xff]
    %v428 = vld [vmem:[%s426 + $0x8] sm:$0xff]
    %v429 = vld [vmem:[%s426 + $0x10] sm:$0xff]
    %v430 = vld [vmem:[%s426 + $0x18] sm:$0xff]
    %v431 = vld [vmem:[%s426 + $0x20] sm:$0xff]
    %v432 = vld [vmem:[%s426 + $0x28] sm:$0xff]
    %v433 = vld [vmem:[%s426 + $0x30] sm:$0xff]
    %v434 = vld [vmem:[%s426 + $0x38] sm:$0xff]
    %s435 = scalar_lea.vmem %s4, 8
    %v436 = vld [vmem:[%s435] sm:$0xff]
    %v437 = vlaneseq
    %v438 = vshrl.u32 %v437, 7
    %v439 = vsub.s32 0, %v438
    %v440 = vrot.slane %v436, %v439
    %v442 = vsel %vm57, %v425, 0
    %444 = vmatprep.subr.mxu0 0.0
    %445 = vmatpush1.msra.mxu0 %v427
    %446 = vmatprep.subr.mxu0 0.0
    %447 = vmatpush1.msra.mxu0 %v428
    %448 = vmatprep.subr.mxu0 0.0
    %449 = vmatpush1.msra.mxu0 %v429
    %450 = vmatprep.subr.mxu0 0.0
    %451 = vmatpush1.msra.mxu0 %v430
    %452 = vmatprep.subr.mxu0 0.0
    %453 = vmatpush1.msra.mxu0 0.0
    %454 = vmatprep.subr.mxu0 0.0
    %455 = vmatpush1.msra.mxu0 0.0
    %456 = vmatprep.subr.mxu0 0.0
    %457 = vmatpush1.msra.mxu0 0.0
    %458 = vmatprep.subr.mxu0 0.0
    %459 = vmatpush1.msra.mxu0 0.0
    %460 = vmatprep.subr.mxu0 0.0
    %461 = vmatpush1.msra.mxu0 0.0
    %462 = vmatprep.subr.mxu0 0.0
    %463 = vmatpush1.msra.mxu0 0.0
    %464 = vmatprep.subr.mxu0 0.0
    %465 = vmatpush1.msra.mxu0 0.0
    %466 = vmatprep.subr.mxu0 0.0
    %467 = vmatpush1.msra.mxu0 0.0
    %468 = vmatprep.subr.mxu0 0.0
    %469 = vmatpush1.msra.mxu0 0.0
    %470 = vmatprep.subr.mxu0 0.0
    %471 = vmatpush1.msra.mxu0 0.0
    %472 = vmatprep.subr.mxu0 0.0
    %473 = vmatpush1.msra.mxu0 0.0
    %474 = vmatprep.subr.mxu0 0.0
    %475 = vmatpush1.msra.mxu0 0.0
    %476 = vmatprep.subr.mxu0 0.0
    %477 = vmatpush1.msra.mxu0 0.0
    %478 = vmatprep.subr.mxu0 0.0
    %479 = vmatpush1.msra.mxu0 0.0
    %480 = vmatprep.subr.mxu0 0.0
    %481 = vmatpush1.msra.mxu0 0.0
    %482 = vmatprep.subr.mxu0 0.0
    %483 = vmatpush1.msra.mxu0 0.0
    %484 = vmatprep.subr.mxu0 0.0
    %485 = vmatpush1.msra.mxu0 0.0
    %486 = vmatprep.subr.mxu0 0.0
    %487 = vmatpush1.msra.mxu0 0.0
    %488 = vmatprep.subr.mxu0 0.0
    %489 = vmatpush1.msra.mxu0 0.0
    %490 = vmatprep.subr.mxu0 0.0
    %491 = vmatpush1.msra.mxu0 0.0
    %492 = vmatprep.subr.mxu0 0.0
    %493 = vmatpush1.msra.mxu0 0.0
    %494 = vmatprep.subr.mxu0 0.0
    %495 = vmatpush1.msra.mxu0 0.0
    %496 = vmatprep.subr.mxu0 0.0
    %497 = vmatpush1.msra.mxu0 0.0
    %498 = vmatprep.subr.mxu0 0.0
    %499 = vmatpush1.msra.mxu0 0.0
    %500 = vmatprep.subr.mxu0 0.0
    %501 = vmatpush1.msra.mxu0 0.0
    %502 = vmatprep.subr.mxu0 0.0
    %503 = vmatpush1.msra.mxu0 0.0
    %504 = vmatprep.subr.mxu0 0.0
    %505 = vmatpush1.msra.mxu0 0.0
    %506 = vmatprep.subr.mxu0 0.0
    %507 = vmatpush1.msra.mxu0 0.0
    %508 = vmatprep.mubr.f32.mxu0 0.0
    %509 = vmatmul.mubr.f32.gmra.mrb[0].mxu0 %v442
    %v510 = vpop.f32.mrb[0].mxu0
    %v511 = vadd.f32 %v440, %v510
    %v512 = vpop.f32.mrb[0].mxu0
    %513 = vdwg.mxu0
    %v514 = vlaneseq
    %v515 = vshrl.u32 %v514, 7
    %v516 = vsub.s32 1, %v515
    %v517 = vrot.slane %v436, %v516
    %v519 = vsel %vm57, %v511, 0
    %521 = vmatprep.subr.mxu0 0.0
    %522 = vmatpush1.msra.mxu0 %v431
    %523 = vmatprep.subr.mxu0 0.0
    %524 = vmatpush1.msra.mxu0 %v432
    %525 = vmatprep.subr.mxu0 0.0
    %526 = vmatpush1.msra.mxu0 %v433
    %527 = vmatprep.subr.mxu0 0.0
    %528 = vmatpush1.msra.mxu0 %v434
    %529 = vmatprep.subr.mxu0 0.0
    %530 = vmatpush1.msra.mxu0 0.0
    %531 = vmatprep.subr.mxu0 0.0
    %532 = vmatpush1.msra.mxu0 0.0
    %533 = vmatprep.subr.mxu0 0.0
    %534 = vmatpush1.msra.mxu0 0.0
    %535 = vmatprep.subr.mxu0 0.0
    %536 = vmatpush1.msra.mxu0 0.0
    %537 = vmatprep.subr.mxu0 0.0
    %538 = vmatpush1.msra.mxu0 0.0
    %539 = vmatprep.subr.mxu0 0.0
    %540 = vmatpush1.msra.mxu0 0.0
    %541 = vmatprep.subr.mxu0 0.0
    %542 = vmatpush1.msra.mxu0 0.0
    %543 = vmatprep.subr.mxu0 0.0
    %544 = vmatpush1.msra.mxu0 0.0
    %545 = vmatprep.subr.mxu0 0.0
    %546 = vmatpush1.msra.mxu0 0.0
    %547 = vmatprep.subr.mxu0 0.0
    %548 = vmatpush1.msra.mxu0 0.0
    %549 = vmatprep.subr.mxu0 0.0
    %550 = vmatpush1.msra.mxu0 0.0
    %551 = vmatprep.subr.mxu0 0.0
    %552 = vmatpush1.msra.mxu0 0.0
    %553 = vmatprep.subr.mxu0 0.0
    %554 = vmatpush1.msra.mxu0 0.0
    %555 = vmatprep.subr.mxu0 0.0
    %556 = vmatpush1.msra.mxu0 0.0
    %557 = vmatprep.subr.mxu0 0.0
    %558 = vmatpush1.msra.mxu0 0.0
    %559 = vmatprep.subr.mxu0 0.0
    %560 = vmatpush1.msra.mxu0 0.0
    %561 = vmatprep.subr.mxu0 0.0
    %562 = vmatpush1.msra.mxu0 0.0
    %563 = vmatprep.subr.mxu0 0.0
    %564 = vmatpush1.msra.mxu0 0.0
    %565 = vmatprep.subr.mxu0 0.0
    %566 = vmatpush1.msra.mxu0 0.0
    %567 = vmatprep.subr.mxu0 0.0
    %568 = vmatpush1.msra.mxu0 0.0
    %569 = vmatprep.subr.mxu0 0.0
    %570 = vmatpush1.msra.mxu0 0.0
    %571 = vmatprep.subr.mxu0 0.0
    %572 = vmatpush1.msra.mxu0 0.0
    %573 = vmatprep.subr.mxu0 0.0
    %574 = vmatpush1.msra.mxu0 0.0
    %575 = vmatprep.subr.mxu0 0.0
    %576 = vmatpush1.msra.mxu0 0.0
    %577 = vmatprep.subr.mxu0 0.0
    %578 = vmatpush1.msra.mxu0 0.0
    %579 = vmatprep.subr.mxu0 0.0
    %580 = vmatpush1.msra.mxu0 0.0
    %581 = vmatprep.subr.mxu0 0.0
    %582 = vmatpush1.msra.mxu0 0.0
    %583 = vmatprep.subr.mxu0 0.0
    %584 = vmatpush1.msra.mxu0 0.0
    %585 = vmatprep.mubr.f32.mxu0 0.0
    %586 = vmatmul.mubr.f32.gmra.mrb[0].mxu0 %v519
    %v587 = vpop.f32.mrb[0].mxu0
    %v588 = vadd.f32 %v517, %v587
    %v589 = vpop.f32.mrb[0].mxu0
    %590 = vdwg.mxu0
    %v591 = vadd.f32 %v425, %v588
    %v592 = vsel %vm209, %v591, 0.0
    %593 = vadd.xlane.f32.xlu0 %v592
    %v594 = vpop.xlane.xlu0 %593
    %v595 = vmul.f32 %v594, %v213
    %v596 = vsub.f32 %v591, %v595
    %v597 = vmul.f32 %v596, %v596
    %v598 = vsel %vm209, %v597, 0.0
    %599 = vadd.xlane.f32.xlu0 %v598
    %v600 = vpop.xlane.xlu0 %599
    %v601 = vmul.f32 %v600, %v213
    %v602 = vadd.f32 %v601, 1e-05
    %v603 = vrsqrt.pop %v602
    %v604 = vmul.f32 %v596, %v603
    %v605 = vlaneseq
    %v606 = vshrl.u32 %v605, 7
    %v607 = vsub.s32 4, %v606
    %v608 = vrot.slane %v436, %v607
    %v609 = vmul.f32 %v604, %v608
    %v610 = vlaneseq
    %v611 = vshrl.u32 %v610, 7
    %v612 = vsub.s32 5, %v611
    %v613 = vrot.slane %v436, %v612
    %v614 = vadd.f32 %v609, %v613
    %s615 = scalar_lea.vmem %s2, 32
    %v616 = vld [vmem:[%s615] sm:$0xff]
    %v617 = vld [vmem:[%s615 + $0x8] sm:$0xff]
    %v618 = vld [vmem:[%s615 + $0x10] sm:$0xff]
    %v619 = vld [vmem:[%s615 + $0x18] sm:$0xff]
    %v620 = vlaneseq
    %v621 = vshrl.u32 %v620, 7
    %v622 = vsub.s32 2, %v621
    %v623 = vrot.slane %v436, %v622
    %v625 = vsel %vm57, %v614, 0
    %627 = vmatprep.subr.mxu0 0.0
    %628 = vmatpush1.msra.mxu0 %v616
    %629 = vmatprep.subr.mxu0 0.0
    %630 = vmatpush1.msra.mxu0 %v617
    %631 = vmatprep.subr.mxu0 0.0
    %632 = vmatpush1.msra.mxu0 %v618
    %633 = vmatprep.subr.mxu0 0.0
    %634 = vmatpush1.msra.mxu0 %v619
    %635 = vmatprep.subr.mxu0 0.0
    %636 = vmatpush1.msra.mxu0 0.0
    %637 = vmatprep.subr.mxu0 0.0
    %638 = vmatpush1.msra.mxu0 0.0
    %639 = vmatprep.subr.mxu0 0.0
    %640 = vmatpush1.msra.mxu0 0.0
    %641 = vmatprep.subr.mxu0 0.0
    %642 = vmatpush1.msra.mxu0 0.0
    %643 = vmatprep.subr.mxu0 0.0
    %644 = vmatpush1.msra.mxu0 0.0
    %645 = vmatprep.subr.mxu0 0.0
    %646 = vmatpush1.msra.mxu0 0.0
    %647 = vmatprep.subr.mxu0 0.0
    %648 = vmatpush1.msra.mxu0 0.0
    %649 = vmatprep.subr.mxu0 0.0
    %650 = vmatpush1.msra.mxu0 0.0
    %651 = vmatprep.subr.mxu0 0.0
    %652 = vmatpush1.msra.mxu0 0.0
    %653 = vmatprep.subr.mxu0 0.0
    %654 = vmatpush1.msra.mxu0 0.0
    %655 = vmatprep.subr.mxu0 0.0
    %656 = vmatpush1.msra.mxu0 0.0
    %657 = vmatprep.subr.mxu0 0.0
    %658 = vmatpush1.msra.mxu0 0.0
    %659 = vmatprep.subr.mxu0 0.0
    %660 = vmatpush1.msra.mxu0 0.0
    %661 = vmatprep.subr.mxu0 0.0
    %662 = vmatpush1.msra.mxu0 0.0
    %663 = vmatprep.subr.mxu0 0.0
    %664 = vmatpush1.msra.mxu0 0.0
    %665 = vmatprep.subr.mxu0 0.0
    %666 = vmatpush1.msra.mxu0 0.0
    %667 = vmatprep.subr.mxu0 0.0
    %668 = vmatpush1.msra.mxu0 0.0
    %669 = vmatprep.subr.mxu0 0.0
    %670 = vmatpush1.msra.mxu0 0.0
    %671 = vmatprep.subr.mxu0 0.0
    %672 = vmatpush1.msra.mxu0 0.0
    %673 = vmatprep.subr.mxu0 0.0
    %674 = vmatpush1.msra.mxu0 0.0
    %675 = vmatprep.subr.mxu0 0.0
    %676 = vmatpush1.msra.mxu0 0.0
    %677 = vmatprep.subr.mxu0 0.0
    %678 = vmatpush1.msra.mxu0 0.0
    %679 = vmatprep.subr.mxu0 0.0
    %680 = vmatpush1.msra.mxu0 0.0
    %681 = vmatprep.subr.mxu0 0.0
    %682 = vmatpush1.msra.mxu0 0.0
    %683 = vmatprep.subr.mxu0 0.0
    %684 = vmatpush1.msra.mxu0 0.0
    %685 = vmatprep.subr.mxu0 0.0
    %686 = vmatpush1.msra.mxu0 0.0
    %687 = vmatprep.subr.mxu0 0.0
    %688 = vmatpush1.msra.mxu0 0.0
    %689 = vmatprep.subr.mxu0 0.0
    %690 = vmatpush1.msra.mxu0 0.0
    %691 = vmatprep.mubr.f32.mxu0 0.0
    %692 = vmatmul.mubr.f32.gmra.mrb[0].mxu0 %v625
    %v693 = vpop.f32.mrb[0].mxu0
    %v694 = vadd.f32 %v623, %v693
    %v695 = vpop.f32.mrb[0].mxu0
    %696 = vdwg.mxu0
    %v697 = vmax.f32 %v694, 0.0
    %s698 = scalar_lea.vmem %s3, 64
    %v699 = vld [vmem:[%s698] sm:$0xff]
    %v700 = vld [vmem:[%s698 + $0x8] sm:$0xff]
    %v701 = vld [vmem:[%s698 + $0x10] sm:$0xff]
    %v702 = vld [vmem:[%s698 + $0x18] sm:$0xff]
    %v703 = vld [vmem:[%s698 + $0x20] sm:$0xff]
    %v704 = vld [vmem:[%s698 + $0x28] sm:$0xff]
    %v705 = vld [vmem:[%s698 + $0x30] sm:$0xff]
    %v706 = vld [vmem:[%s698 + $0x38] sm:$0xff]
    %v707 = vlaneseq
    %v708 = vshrl.u32 %v707, 7
    %v709 = vsub.s32 3, %v708
    %v710 = vrot.slane %v436, %v709
    %v712 = vsel %vm328, %v697, 0
    %714 = vmatprep.subr.mxu0 0.0
    %715 = vmatpush1.msra.mxu0 %v699
    %716 = vmatprep.subr.mxu0 0.0
    %717 = vmatpush1.msra.mxu0 %v700
    %718 = vmatprep.subr.mxu0 0.0
    %719 = vmatpush1.msra.mxu0 %v701
    %720 = vmatprep.subr.mxu0 0.0
    %721 = vmatpush1.msra.mxu0 %v702
    %722 = vmatprep.subr.mxu0 0.0
    %723 = vmatpush1.msra.mxu0 %v703
    %724 = vmatprep.subr.mxu0 0.0
    %725 = vmatpush1.msra.mxu0 %v704
    %726 = vmatprep.subr.mxu0 0.0
    %727 = vmatpush1.msra.mxu0 %v705
    %728 = vmatprep.subr.mxu0 0.0
    %729 = vmatpush1.msra.mxu0 %v706
    %730 = vmatprep.subr.mxu0 0.0
    %731 = vmatpush1.msra.mxu0 0.0
    %732 = vmatprep.subr.mxu0 0.0
    %733 = vmatpush1.msra.mxu0 0.0
    %734 = vmatprep.subr.mxu0 0.0
    %735 = vmatpush1.msra.mxu0 0.0
    %736 = vmatprep.subr.mxu0 0.0
    %737 = vmatpush1.msra.mxu0 0.0
    %738 = vmatprep.subr.mxu0 0.0
    %739 = vmatpush1.msra.mxu0 0.0
    %740 = vmatprep.subr.mxu0 0.0
    %741 = vmatpush1.msra.mxu0 0.0
    %742 = vmatprep.subr.mxu0 0.0
    %743 = vmatpush1.msra.mxu0 0.0
    %744 = vmatprep.subr.mxu0 0.0
    %745 = vmatpush1.msra.mxu0 0.0
    %746 = vmatprep.subr.mxu0 0.0
    %747 = vmatpush1.msra.mxu0 0.0
    %748 = vmatprep.subr.mxu0 0.0
    %749 = vmatpush1.msra.mxu0 0.0
    %750 = vmatprep.subr.mxu0 0.0
    %751 = vmatpush1.msra.mxu0 0.0
    %752 = vmatprep.subr.mxu0 0.0
    %753 = vmatpush1.msra.mxu0 0.0
    %754 = vmatprep.subr.mxu0 0.0
    %755 = vmatpush1.msra.mxu0 0.0
    %756 = vmatprep.subr.mxu0 0.0
    %757 = vmatpush1.msra.mxu0 0.0
    %758 = vmatprep.subr.mxu0 0.0
    %759 = vmatpush1.msra.mxu0 0.0
    %760 = vmatprep.subr.mxu0 0.0
    %761 = vmatpush1.msra.mxu0 0.0
    %762 = vmatprep.subr.mxu0 0.0
    %763 = vmatpush1.msra.mxu0 0.0
    %764 = vmatprep.subr.mxu0 0.0
    %765 = vmatpush1.msra.mxu0 0.0
    %766 = vmatprep.subr.mxu0 0.0
    %767 = vmatpush1.msra.mxu0 0.0
    %768 = vmatprep.subr.mxu0 0.0
    %769 = vmatpush1.msra.mxu0 0.0
    %770 = vmatprep.subr.mxu0 0.0
    %771 = vmatpush1.msra.mxu0 0.0
    %772 = vmatprep.subr.mxu0 0.0
    %773 = vmatpush1.msra.mxu0 0.0
    %774 = vmatprep.subr.mxu0 0.0
    %775 = vmatpush1.msra.mxu0 0.0
    %776 = vmatprep.subr.mxu0 0.0
    %777 = vmatpush1.msra.mxu0 0.0
    %778 = vmatprep.mubr.f32.mxu0 0.0
    %779 = vmatmul.mubr.f32.gmra.mrb[0].mxu0 %v712
    %v780 = vpop.f32.mrb[0].mxu0
    %v781 = vadd.f32 %v710, %v780
    %v782 = vpop.f32.mrb[0].mxu0
    %783 = vdwg.mxu0
    %v784 = vadd.f32 %v614, %v781
    %v785 = vsel %vm209, %v784, 0.0
    %786 = vadd.xlane.f32.xlu0 %v785
    %v787 = vpop.xlane.xlu0 %786
    %v788 = vmul.f32 %v787, %v213
    %v789 = vsub.f32 %v784, %v788
    %v790 = vmul.f32 %v789, %v789
    %v791 = vsel %vm209, %v790, 0.0
    %792 = vadd.xlane.f32.xlu0 %v791
    %v793 = vpop.xlane.xlu0 %792
    %v794 = vmul.f32 %v793, %v213
    %v795 = vadd.f32 %v794, 1e-05
    %v796 = vrsqrt.pop %v795
    %v797 = vmul.f32 %v789, %v796
    %v798 = vlaneseq
    %v799 = vshrl.u32 %v798, 7
    %v800 = vsub.s32 6, %v799
    %v801 = vrot.slane %v436, %v800
    %v802 = vmul.f32 %v797, %v801
    %v803 = vlaneseq
    %v804 = vshrl.u32 %v803, 7
    %v805 = vsub.s32 7, %v804
    %v806 = vrot.slane %v436, %v805
    %v807 = vadd.f32 %v802, %v806
    %808 = vst.msk [vmem:[#allocation2] sm:$0x3] %vm209, %v807
    %v809 = vld [vmem:[%s5] sm:$0xff]
    %v810 = vld [vmem:[%s5 + $0x8] sm:$0xff]
    %v811 = vld [vmem:[%s5 + $0x10] sm:$0xff]
    %v812 = vld [vmem:[%s5 + $0x18] sm:$0xff]
    %v813 = vld [vmem:[%s5 + $0x20] sm:$0xff]
    %v814 = vld [vmem:[%s5 + $0x28] sm:$0xff]
    %v815 = vld [vmem:[%s5 + $0x30] sm:$0xff]
    %v816 = vld [vmem:[%s5 + $0x38] sm:$0xff]
    %v817 = vlaneseq
    %v818 = vshrl.u32 %v817, 7
    %v819 = vsub.s32 0, %v818
    %v820 = vrot.slane %v36, %v819
    %v822 = vsel %vm57, %v807, 0
    %824 = vmatprep.subr.mxu0 0.0
    %825 = vmatpush1.msra.mxu0 %v809
    %826 = vmatprep.subr.mxu0 0.0
    %827 = vmatpush1.msra.mxu0 %v810
    %828 = vmatprep.subr.mxu0 0.0
    %829 = vmatpush1.msra.mxu0 %v811
    %830 = vmatprep.subr.mxu0 0.0
    %831 = vmatpush1.msra.mxu0 %v812
    %832 = vmatprep.subr.mxu0 0.0
    %833 = vmatpush1.msra.mxu0 0.0
    %834 = vmatprep.subr.mxu0 0.0
    %835 = vmatpush1.msra.mxu0 0.0
    %836 = vmatprep.subr.mxu0 0.0
    %837 = vmatpush1.msra.mxu0 0.0
    %838 = vmatprep.subr.mxu0 0.0
    %839 = vmatpush1.msra.mxu0 0.0
    %840 = vmatprep.subr.mxu0 0.0
    %841 = vmatpush1.msra.mxu0 0.0
    %842 = vmatprep.subr.mxu0 0.0
    %843 = vmatpush1.msra.mxu0 0.0
    %844 = vmatprep.subr.mxu0 0.0
    %845 = vmatpush1.msra.mxu0 0.0
    %846 = vmatprep.subr.mxu0 0.0
    %847 = vmatpush1.msra.mxu0 0.0
    %848 = vmatprep.subr.mxu0 0.0
    %849 = vmatpush1.msra.mxu0 0.0
    %850 = vmatprep.subr.mxu0 0.0
    %851 = vmatpush1.msra.mxu0 0.0
    %852 = vmatprep.subr.mxu0 0.0
    %853 = vmatpush1.msra.mxu0 0.0
    %854 = vmatprep.subr.mxu0 0.0
    %855 = vmatpush1.msra.mxu0 0.0
    %856 = vmatprep.subr.mxu0 0.0
    %857 = vmatpush1.msra.mxu0 0.0
    %858 = vmatprep.subr.mxu0 0.0
    %859 = vmatpush1.msra.mxu0 0.0
    %860 = vmatprep.subr.mxu0 0.0
    %861 = vmatpush1.msra.mxu0 0.0
    %862 = vmatprep.subr.mxu0 0.0
    %863 = vmatpush1.msra.mxu0 0.0
    %864 = vmatprep.subr.mxu0 0.0
    %865 = vmatpush1.msra.mxu0 0.0
    %866 = vmatprep.subr.mxu0 0.0
    %867 = vmatpush1.msra.mxu0 0.0
    %868 = vmatprep.subr.mxu0 0.0
    %869 = vmatpush1.msra.mxu0 0.0
    %870 = vmatprep.subr.mxu0 0.0
    %871 = vmatpush1.msra.mxu0 0.0
    %872 = vmatprep.subr.mxu0 0.0
    %873 = vmatpush1.msra.mxu0 0.0
    %874 = vmatprep.subr.mxu0 0.0
    %875 = vmatpush1.msra.mxu0 0.0
    %876 = vmatprep.subr.mxu0 0.0
    %877 = vmatpush1.msra.mxu0 0.0
    %878 = vmatprep.subr.mxu0 0.0
    %879 = vmatpush1.msra.mxu0 0.0
    %880 = vmatprep.subr.mxu0 0.0
    %881 = vmatpush1.msra.mxu0 0.0
    %882 = vmatprep.subr.mxu0 0.0
    %883 = vmatpush1.msra.mxu0 0.0
    %884 = vmatprep.subr.mxu0 0.0
    %885 = vmatpush1.msra.mxu0 0.0
    %886 = vmatprep.subr.mxu0 0.0
    %887 = vmatpush1.msra.mxu0 0.0
    %888 = vmatprep.mubr.f32.mxu0 0.0
    %889 = vmatmul.mubr.f32.gmra.mrb[0].mxu0 %v822
    %v890 = vpop.f32.mrb[0].mxu0
    %v891 = vadd.f32 %v820, %v890
    %v892 = vpop.f32.mrb[0].mxu0
    %893 = vdwg.mxu0
    %v894 = vlaneseq
    %v895 = vshrl.u32 %v894, 7
    %v896 = vsub.s32 1, %v895
    %v897 = vrot.slane %v36, %v896
    %v899 = vsel %vm57, %v891, 0
    %901 = vmatprep.subr.mxu0 0.0
    %902 = vmatpush1.msra.mxu0 %v813
    %903 = vmatprep.subr.mxu0 0.0
    %904 = vmatpush1.msra.mxu0 %v814
    %905 = vmatprep.subr.mxu0 0.0
    %906 = vmatpush1.msra.mxu0 %v815
    %907 = vmatprep.subr.mxu0 0.0
    %908 = vmatpush1.msra.mxu0 %v816
    %909 = vmatprep.subr.mxu0 0.0
    %910 = vmatpush1.msra.mxu0 0.0
    %911 = vmatprep.subr.mxu0 0.0
    %912 = vmatpush1.msra.mxu0 0.0
    %913 = vmatprep.subr.mxu0 0.0
    %914 = vmatpush1.msra.mxu0 0.0
    %915 = vmatprep.subr.mxu0 0.0
    %916 = vmatpush1.msra.mxu0 0.0
    %917 = vmatprep.subr.mxu0 0.0
    %918 = vmatpush1.msra.mxu0 0.0
    %919 = vmatprep.subr.mxu0 0.0
    %920 = vmatpush1.msra.mxu0 0.0
    %921 = vmatprep.subr.mxu0 0.0
    %922 = vmatpush1.msra.mxu0 0.0
    %923 = vmatprep.subr.mxu0 0.0
    %924 = vmatpush1.msra.mxu0 0.0
    %925 = vmatprep.subr.mxu0 0.0
    %926 = vmatpush1.msra.mxu0 0.0
    %927 = vmatprep.subr.mxu0 0.0
    %928 = vmatpush1.msra.mxu0 0.0
    %929 = vmatprep.subr.mxu0 0.0
    %930 = vmatpush1.msra.mxu0 0.0
    %931 = vmatprep.subr.mxu0 0.0
    %932 = vmatpush1.msra.mxu0 0.0
    %933 = vmatprep.subr.mxu0 0.0
    %934 = vmatpush1.msra.mxu0 0.0
    %935 = vmatprep.subr.mxu0 0.0
    %936 = vmatpush1.msra.mxu0 0.0
    %937 = vmatprep.subr.mxu0 0.0
    %938 = vmatpush1.msra.mxu0 0.0
    %939 = vmatprep.subr.mxu0 0.0
    %940 = vmatpush1.msra.mxu0 0.0
    %941 = vmatprep.subr.mxu0 0.0
    %942 = vmatpush1.msra.mxu0 0.0
    %943 = vmatprep.subr.mxu0 0.0
    %944 = vmatpush1.msra.mxu0 0.0
    %945 = vmatprep.subr.mxu0 0.0
    %946 = vmatpush1.msra.mxu0 0.0
    %947 = vmatprep.subr.mxu0 0.0
    %948 = vmatpush1.msra.mxu0 0.0
    %949 = vmatprep.subr.mxu0 0.0
    %950 = vmatpush1.msra.mxu0 0.0
    %951 = vmatprep.subr.mxu0 0.0
    %952 = vmatpush1.msra.mxu0 0.0
    %953 = vmatprep.subr.mxu0 0.0
    %954 = vmatpush1.msra.mxu0 0.0
    %955 = vmatprep.subr.mxu0 0.0
    %956 = vmatpush1.msra.mxu0 0.0
    %957 = vmatprep.subr.mxu0 0.0
    %958 = vmatpush1.msra.mxu0 0.0
    %959 = vmatprep.subr.mxu0 0.0
    %960 = vmatpush1.msra.mxu0 0.0
    %961 = vmatprep.subr.mxu0 0.0
    %962 = vmatpush1.msra.mxu0 0.0
    %963 = vmatprep.subr.mxu0 0.0
    %964 = vmatpush1.msra.mxu0 0.0
    %965 = vmatprep.mubr.f32.mxu0 0.0
    %966 = vmatmul.mubr.f32.gmra.mrb[0].mxu0 %v899
    %v967 = vpop.f32.mrb[0].mxu0
    %v968 = vadd.f32 %v897, %v967
    %v969 = vpop.f32.mrb[0].mxu0
    %970 = vdwg.mxu0
    %v971 = vld [vmem:[%s6] sm:$0xff]
    %v972 = vld [vmem:[%s6 + $0x8] sm:$0xff]
    %v973 = vld [vmem:[%s6 + $0x10] sm:$0xff]
    %v974 = vld [vmem:[%s6 + $0x18] sm:$0xff]
    %v975 = vlaneseq
    %v976 = vshrl.u32 %v975, 7
    %v977 = vsub.s32 2, %v976
    %v978 = vrot.slane %v36, %v977
    %v980 = vsel %vm57, %v968, 0
    %982 = vmatprep.subr.mxu0 0.0
    %983 = vmatpush1.msra.mxu0 %v971
    %984 = vmatprep.subr.mxu0 0.0
    %985 = vmatpush1.msra.mxu0 %v972
    %986 = vmatprep.subr.mxu0 0.0
    %987 = vmatpush1.msra.mxu0 %v973
    %988 = vmatprep.subr.mxu0 0.0
    %989 = vmatpush1.msra.mxu0 %v974
    %990 = vmatprep.subr.mxu0 0.0
    %991 = vmatpush1.msra.mxu0 0.0
    %992 = vmatprep.subr.mxu0 0.0
    %993 = vmatpush1.msra.mxu0 0.0
    %994 = vmatprep.subr.mxu0 0.0
    %995 = vmatpush1.msra.mxu0 0.0
    %996 = vmatprep.subr.mxu0 0.0
    %997 = vmatpush1.msra.mxu0 0.0
    %998 = vmatprep.subr.mxu0 0.0
    %999 = vmatpush1.msra.mxu0 0.0
    %1000 = vmatprep.subr.mxu0 0.0
    %1001 = vmatpush1.msra.mxu0 0.0
    %1002 = vmatprep.subr.mxu0 0.0
    %1003 = vmatpush1.msra.mxu0 0.0
    %1004 = vmatprep.subr.mxu0 0.0
    %1005 = vmatpush1.msra.mxu0 0.0
    %1006 = vmatprep.subr.mxu0 0.0
    %1007 = vmatpush1.msra.mxu0 0.0
    %1008 = vmatprep.subr.mxu0 0.0
    %1009 = vmatpush1.msra.mxu0 0.0
    %1010 = vmatprep.subr.mxu0 0.0
    %1011 = vmatpush1.msra.mxu0 0.0
    %1012 = vmatprep.subr.mxu0 0.0
    %1013 = vmatpush1.msra.mxu0 0.0
    %1014 = vmatprep.subr.mxu0 0.0
    %1015 = vmatpush1.msra.mxu0 0.0
    %1016 = vmatprep.subr.mxu0 0.0
    %1017 = vmatpush1.msra.mxu0 0.0
    %1018 = vmatprep.subr.mxu0 0.0
    %1019 = vmatpush1.msra.mxu0 0.0
    %1020 = vmatprep.subr.mxu0 0.0
    %1021 = vmatpush1.msra.mxu0 0.0
    %1022 = vmatprep.subr.mxu0 0.0
    %1023 = vmatpush1.msra.mxu0 0.0
    %1024 = vmatprep.subr.mxu0 0.0
    %1025 = vmatpush1.msra.mxu0 0.0
    %1026 = vmatprep.subr.mxu0 0.0
    %1027 = vmatpush1.msra.mxu0 0.0
    %1028 = vmatprep.subr.mxu0 0.0
    %1029 = vmatpush1.msra.mxu0 0.0
    %1030 = vmatprep.subr.mxu0 0.0
    %1031 = vmatpush1.msra.mxu0 0.0
    %1032 = vmatprep.subr.mxu0 0.0
    %1033 = vmatpush1.msra.mxu0 0.0
    %1034 = vmatprep.subr.mxu0 0.0
    %1035 = vmatpush1.msra.mxu0 0.0
    %1036 = vmatprep.subr.mxu0 0.0
    %1037 = vmatpush1.msra.mxu0 0.0
    %1038 = vmatprep.subr.mxu0 0.0
    %1039 = vmatpush1.msra.mxu0 0.0
    %1040 = vmatprep.subr.mxu0 0.0
    %1041 = vmatpush1.msra.mxu0 0.0
    %1042 = vmatprep.subr.mxu0 0.0
    %1043 = vmatpush1.msra.mxu0 0.0
    %1044 = vmatprep.subr.mxu0 0.0
    %1045 = vmatpush1.msra.mxu0 0.0
    %1046 = vmatprep.mubr.f32.mxu0 0.0
    %1047 = vmatmul.mubr.f32.gmra.mrb[0].mxu0 %v980
    %v1048 = vpop.f32.mrb[0].mxu0
    %v1049 = vadd.f32 %v978, %v1048
    %v1050 = vpop.f32.mrb[0].mxu0
    %1051 = vdwg.mxu0
    %v1052 = vmax.f32 %v1049, 0.0
    %v1053 = vld [vmem:[%s7] sm:$0xff]
    %v1054 = vld [vmem:[%s7 + $0x8] sm:$0xff]
    %v1055 = vld [vmem:[%s7 + $0x10] sm:$0xff]
    %v1056 = vld [vmem:[%s7 + $0x18] sm:$0xff]
    %v1057 = vld [vmem:[%s7 + $0x20] sm:$0xff]
    %v1058 = vld [vmem:[%s7 + $0x28] sm:$0xff]
    %v1059 = vld [vmem:[%s7 + $0x30] sm:$0xff]
    %v1060 = vld [vmem:[%s7 + $0x38] sm:$0xff]
    %v1061 = vlaneseq
    %v1062 = vshrl.u32 %v1061, 7
    %v1063 = vsub.s32 3, %v1062
    %v1064 = vrot.slane %v36, %v1063
    %v1066 = vsel %vm328, %v1052, 0
    %1068 = vmatprep.subr.mxu0 0.0
    %1069 = vmatpush1.msra.mxu0 %v1053
    %1070 = vmatprep.subr.mxu0 0.0
    %1071 = vmatpush1.msra.mxu0 %v1054
    %1072 = vmatprep.subr.mxu0 0.0
    %1073 = vmatpush1.msra.mxu0 %v1055
    %1074 = vmatprep.subr.mxu0 0.0
    %1075 = vmatpush1.msra.mxu0 %v1056
    %1076 = vmatprep.subr.mxu0 0.0
    %1077 = vmatpush1.msra.mxu0 %v1057
    %1078 = vmatprep.subr.mxu0 0.0
    %1079 = vmatpush1.msra.mxu0 %v1058
    %1080 = vmatprep.subr.mxu0 0.0
    %1081 = vmatpush1.msra.mxu0 %v1059
    %1082 = vmatprep.subr.mxu0 0.0
    %1083 = vmatpush1.msra.mxu0 %v1060
    %1084 = vmatprep.subr.mxu0 0.0
    %1085 = vmatpush1.msra.mxu0 0.0
    %1086 = vmatprep.subr.mxu0 0.0
    %1087 = vmatpush1.msra.mxu0 0.0
    %1088 = vmatprep.subr.mxu0 0.0
    %1089 = vmatpush1.msra.mxu0 0.0
    %1090 = vmatprep.subr.mxu0 0.0
    %1091 = vmatpush1.msra.mxu0 0.0
    %1092 = vmatprep.subr.mxu0 0.0
    %1093 = vmatpush1.msra.mxu0 0.0
    %1094 = vmatprep.subr.mxu0 0.0
    %1095 = vmatpush1.msra.mxu0 0.0
    %1096 = vmatprep.subr.mxu0 0.0
    %1097 = vmatpush1.msra.mxu0 0.0
    %1098 = vmatprep.subr.mxu0 0.0
    %1099 = vmatpush1.msra.mxu0 0.0
    %1100 = vmatprep.subr.mxu0 0.0
    %1101 = vmatpush1.msra.mxu0 0.0
    %1102 = vmatprep.subr.mxu0 0.0
    %1103 = vmatpush1.msra.mxu0 0.0
    %1104 = vmatprep.subr.mxu0 0.0
    %1105 = vmatpush1.msra.mxu0 0.0
    %1106 = vmatprep.subr.mxu0 0.0
    %1107 = vmatpush1.msra.mxu0 0.0
    %1108 = vmatprep.subr.mxu0 0.0
    %1109 = vmatpush1.msra.mxu0 0.0
    %1110 = vmatprep.subr.mxu0 0.0
    %1111 = vmatpush1.msra.mxu0 0.0
    %1112 = vmatprep.subr.mxu0 0.0
    %1113 = vmatpush1.msra.mxu0 0.0
    %1114 = vmatprep.subr.mxu0 0.0
    %1115 = vmatpush1.msra.mxu0 0.0
    %1116 = vmatprep.subr.mxu0 0.0
    %1117 = vmatpush1.msra.mxu0 0.0
    %1118 = vmatprep.subr.mxu0 0.0
    %1119 = vmatpush1.msra.mxu0 0.0
    %1120 = vmatprep.subr.mxu0 0.0
    %1121 = vmatpush1.msra.mxu0 0.0
    %1122 = vmatprep.subr.mxu0 0.0
    %1123 = vmatpush1.msra.mxu0 0.0
    %1124 = vmatprep.subr.mxu0 0.0
    %1125 = vmatpush1.msra.mxu0 0.0
    %1126 = vmatprep.subr.mxu0 0.0
    %1127 = vmatpush1.msra.mxu0 0.0
    %1128 = vmatprep.subr.mxu0 0.0
    %1129 = vmatpush1.msra.mxu0 0.0
    %1130 = vmatprep.subr.mxu0 0.0
    %1131 = vmatpush1.msra.mxu0 0.0
    %1132 = vmatprep.mubr.f32.mxu0 0.0
    %1133 = vmatmul.mubr.f32.gmra.mrb[0].mxu0 %v1066
    %v1134 = vpop.f32.mrb[0].mxu0
    %v1135 = vadd.f32 %v1064, %v1134
    %v1136 = vpop.f32.mrb[0].mxu0
    %1137 = vdwg.mxu0
    %1138 = vst [vmem:[#allocation4] sm:$0x3] %v1135
    // Predicated region
    $region38: #{tpu_custom_call.1} parent=1 // pred_check
      _
    $region39: #{tpu_custom_call.1} parent=1 // pred_check_branch
      %1140 = sbr.rel (0) target = $region41
    $region40: #{tpu_custom_call.1} parent=1 // pred_region
      %s1142 = ssub.s32 32, 32
      %1143 = vsyncadd [#allocation3], %s1142
      %s1145 = sshll.u32 [#allocation2], 4
      %s1146 = int_to_ptr.vmem [resolvable:$true] %s1145
      %1148 = dma.vmem_to_hbm [thread:$0]  %s1146, 32, %s9, [#allocation3]
    $region41: #{tpu_custom_call.1} parent=1 // pred_fallthru
      _
    // Predicated region
    $region42: #{tpu_custom_call.1} parent=1 // pred_check
      _
    $region43: #{tpu_custom_call.1} parent=1 // pred_check_branch
      %1150 = sbr.rel (0) target = $region45
    $region44: #{tpu_custom_call.1} parent=1 // pred_region
      %s1152 = ssub.s32 32, 32
      %1153 = vsyncadd [#allocation5], %s1152
      %s1155 = sshll.u32 [#allocation4], 4
      %s1156 = int_to_ptr.vmem [resolvable:$true] %s1155
      %1158 = dma.vmem_to_hbm [thread:$0]  %s1156, 32, %s10, [#allocation5]
    $region45: #{tpu_custom_call.1} parent=1 // pred_fallthru
      _
    // Predicated region
    $region46: #{tpu_custom_call.1} parent=1 // pred_check
      _
    $region47: #{tpu_custom_call.1} parent=1 // pred_check_branch
      %1160 = sbr.rel (0) target = $region49
    $region48: #{tpu_custom_call.1} parent=1 // pred_region
      %1161 = dma.done [#allocation3], 32
    $region49: #{tpu_custom_call.1} parent=1 // pred_fallthru
      _
    // Predicated region
    $region50: #{tpu_custom_call.1} parent=1 // pred_check
      _
    $region51: #{tpu_custom_call.1} parent=1 // pred_check_branch
      %1163 = sbr.rel (0) target = $region53
    $region52: #{tpu_custom_call.1} parent=1 // pred_region
      %1164 = dma.done [#allocation5], 32
    $region53: #{tpu_custom_call.1} parent=1 // pred_fallthru
      _
    %1165 = vsyncpa [#allocation3], 1
    %1166 = vsyncpa [#allocation5], 1

</llo_original>
